<compile_context>
chip_gen: v7x
topology: tpu7x:2x2x1
jax: 0.10.0
libtpu: 0.0.40
codegen_flags: <defaults>
</compile_context>

<pallas_src>
import functools

import jax
import jax.numpy as jnp
from jax.experimental import pallas as pl
from jax.experimental.pallas import tpu as pltpu


# ----------------------------- fused kernel --------------------------------
def _mycnn_fused_kernel(x_ref, w1_ref, b1_ref, w2_ref, b2_ref, wfc_ref, bfc_ref,
                        o_ref,
                        act_ref, pad2_ref, p2_ref,
                        *, N, H1, W1, C1, H2, W2, C2, H3):
    f32, bf16 = jnp.float32, jnp.bfloat16
    L1 = W1 * C1            # conv1 output lane width (== pad2 lane width)
    L2 = W2 * C2            # conv2 output lane width (== pool2 lane width)

    # ---------------- conv1 + bias + relu: 3 banded MXU matmuls -------------
    # LHS per ky = whole-batch padded rows [ky, ky+H1), stacked along M.
    acc1 = jnp.zeros((N * H1, L1), f32)
    for ky in range(3):
        lhs = jnp.concatenate(
            [x_ref[n, ky:ky + H1, :] for n in range(N)], axis=0).astype(bf16)
        acc1 = acc1 + jnp.dot(lhs, w1_ref[ky], preferred_element_type=f32)
    act_ref[...] = jnp.maximum(acc1 + b1_ref[...], 0.0)        # (N*H1, L1)

    # ---------------- maxpool1 2x2 (vectorized) -----------------------------
    # vertical: even/odd rows via strided loads; horizontal: roll lanes by C1.
    v1 = jnp.maximum(act_ref[pl.ds(0, N * H2, stride=2), :],
                     act_ref[pl.ds(1, N * H2, stride=2), :])    # (N*H2, L1)
    h1 = jnp.maximum(v1, pltpu.roll(v1, shift=L1 - C1, axis=1))
    # valid pooled values live at lanes 2*wo*C1 + c; other lanes are garbage
    # and are ignored (zero rows) by the conv2 weight.

    # row-padded conv2 input: zero once per forward, then full-lane interiors.
    pad2_ref[...] = jnp.zeros_like(pad2_ref)
    for n in range(N):
        r0 = n * (H2 + 2) + 1
        pad2_ref[r0:r0 + H2, :] = h1[n * H2:(n + 1) * H2, :]

    # ---------------- conv2 + bias + relu: 3 banded MXU matmuls -------------
    # Horizontal SAME padding is folded into w2 (clipped taps); the weight reads
    # the uncompacted pool-1 lane layout directly.
    acc2 = jnp.zeros((N * H2, L2), f32)
    for ky in range(3):
        lhs = jnp.concatenate(
            [pad2_ref[n * (H2 + 2) + ky:n * (H2 + 2) + ky + H2, :]
             for n in range(N)], axis=0).astype(bf16)
        acc2 = acc2 + jnp.dot(lhs, w2_ref[ky], preferred_element_type=f32)
    act_ref[0:N * H2, :] = jnp.maximum(acc2 + b2_ref[...], 0.0)  # reuse scratch

    # ---------------- maxpool2 2x2 (vectorized) -----------------------------
    v2 = jnp.maximum(act_ref[pl.ds(0, N * H3, stride=2), :],
                     act_ref[pl.ds(1, N * H3, stride=2), :])     # (N*H3, L2)
    p2_ref[...] = jnp.maximum(v2, pltpu.roll(v2, shift=L2 - C2, axis=1))

    # ---------------- fc (lane compaction + NCHW flatten folded into wfc) ---
    accf = jnp.zeros((N, o_ref.shape[1]), f32)
    for ho in range(H3):
        lhs = p2_ref[pl.ds(ho, N, stride=H3), :].astype(bf16)    # rows n*H3+ho
        accf = accf + jnp.dot(lhs, wfc_ref[ho], preferred_element_type=f32)
    o_ref[...] = (accf + bfc_ref[...]).astype(o_ref.dtype)


# ----------------------------- parameter prep ------------------------------
def _band_conv1(w, w_out):
    """(C1, C0, 3, 3) -> (3, (w_out+2)*C0, w_out*C1); kx folded into the band."""
    taps = []
    for ky in range(3):
        m = 0.0
        for kx in range(3):
            sel = jnp.eye(w_out + 2, w_out, k=-kx, dtype=jnp.float32)  # [wo+kx, wo]=1
            m = m + jnp.kron(sel, w[:, :, ky, kx].T.astype(jnp.float32))
        taps.append(m)
    return jnp.stack(taps, axis=0)


def _band_conv2(w, w_out):
    """(C2, C1, 3, 3) -> (3, 2*w_out*C1, w_out*C2).

    Reads the UNCOMPACTED pool-1 lane layout (valid data at even w-slots);
    horizontal SAME padding is handled by clipping out-of-range taps.
    """
    interleave = jnp.array([[1.0], [0.0]], jnp.float32)   # place block at even slot
    taps = []
    for ky in range(3):
        m = 0.0
        for kx in range(3):
            sel = jnp.eye(w_out, w_out, k=1 - kx, dtype=jnp.float32)   # [wi, wo]=1, wi=wo-1+kx
            sel2 = jnp.kron(sel, interleave)                           # (2*w_out, w_out)
            m = m + jnp.kron(sel2, w[:, :, ky, kx].T.astype(jnp.float32))
        taps.append(m)
    return jnp.stack(taps, axis=0)


def _band_fc(fc_w, c2, h3, w3, opad):
    """(ncls, c2*h3*w3) -> (h3, 2*w3*c2, opad).

    Row index is the uncompacted pool-2 lane (2*wo*c2 + c); PyTorch's NCHW
    flatten order and the 102 -> 128 output pad are folded in.
    """
    ncls = fc_w.shape[0]
    w4 = fc_w.reshape(ncls, c2, h3, w3).astype(jnp.float32)
    mats = []
    for ho in range(h3):
        blk = jnp.transpose(w4[:, :, ho, :], (2, 1, 0))               # (w3, c2, ncls)
        blk2 = jnp.stack([blk, jnp.zeros_like(blk)], axis=1)          # valid at even slot
        m = blk2.reshape(w3 * 2 * c2, ncls)
        mats.append(jnp.pad(m, ((0, 0), (0, opad - ncls))))
    return jnp.stack(mats, axis=0)


def prepare_params(params, *, img_h=16, img_w=16):
    """One-time layout / precision prep (outside the per-forward path)."""
    c1 = params["conv1_w"].shape[0]
    c2 = params["conv2_w"].shape[0]
    ncls = params["fc_w"].shape[0]
    w1sp, w2sp = img_w, img_w // 2
    h3, w3 = img_h // 4, img_w // 4
    opad = ((ncls + 127) // 128) * 128

    return {
        "w1": _band_conv1(params["conv1_w"], w1sp).astype(jnp.bfloat16),   # (3, 54, 128)
        "b1": jnp.tile(params["conv1_b"], w1sp).reshape(1, w1sp * c1).astype(jnp.float32),
        "w2": _band_conv2(params["conv2_w"], w2sp).astype(jnp.bfloat16),   # (3, 128, 128)
        "b2": jnp.tile(params["conv2_b"], w2sp).reshape(1, w2sp * c2).astype(jnp.float32),
        "wfc": _band_fc(params["fc_w"], c2, h3, w3, opad).astype(jnp.bfloat16),  # (4,128,128)
        "bfc": jnp.pad(params["fc_b"], (0, opad - ncls)).reshape(1, opad).astype(jnp.float32),
    }


# ------------------------------- forward ------------------------------------
def mycnn_forward(prepared, x_nchw, num_classes):
    # Layout glue on the tiny input only: NCHW -> NHWC, 'same' spatial pad,
    # fold (W, C) into the lane dim.
    N, C0, H, W = x_nchw.shape
    x = jnp.transpose(x_nchw, (0, 2, 3, 1))
    x = jnp.pad(x, ((0, 0), (1, 1), (1, 1), (0, 0)))
    xin = x.reshape(N, H + 2, (W + 2) * C0)

    H1, W1 = H, W
    H2, W2 = H // 2, W // 2
    H3 = H // 4
    C1 = prepared["b1"].shape[1] // W1
    C2 = prepared["b2"].shape[1] // W2
    OP = prepared["wfc"].shape[2]
    assert W1 * C1 == W2 * C2, "scratch reuse requires equal lane widths"
    assert prepared["w2"].shape[1] == 2 * W2 * C1

    kernel = functools.partial(
        _mycnn_fused_kernel, N=N, H1=H1, W1=W1, C1=C1,
        H2=H2, W2=W2, C2=C2, H3=H3)

    out_pad = pl.pallas_call(
        kernel,
        out_shape=jax.ShapeDtypeStruct((N, OP), jnp.float32),
        grid_spec=pltpu.PrefetchScalarGridSpec(
            num_scalar_prefetch=0,
            grid=(1,),
            in_specs=[
                pl.BlockSpec(xin.shape, lambda i: (0, 0, 0)),
                pl.BlockSpec(prepared["w1"].shape, lambda i: (0, 0, 0)),
                pl.BlockSpec(prepared["b1"].shape, lambda i: (0, 0)),
                pl.BlockSpec(prepared["w2"].shape, lambda i: (0, 0, 0)),
                pl.BlockSpec(prepared["b2"].shape, lambda i: (0, 0)),
                pl.BlockSpec(prepared["wfc"].shape, lambda i: (0, 0, 0)),
                pl.BlockSpec(prepared["bfc"].shape, lambda i: (0, 0)),
            ],
            out_specs=pl.BlockSpec((N, OP), lambda i: (0, 0)),
            scratch_shapes=[
                pltpu.VMEM((N * H1, W1 * C1), jnp.float32),           # act1 / act2
                pltpu.VMEM((N * (H2 + 2), 2 * W2 * C1), jnp.float32),  # row-padded pool1
                pltpu.VMEM((N * H3, W2 * C2), jnp.float32),           # pool2 (uncompacted)
            ],
        ),
        compiler_params=pltpu.CompilerParams(
            dimension_semantics=("arbitrary",)),
    )(xin, prepared["w1"], prepared["b1"], prepared["w2"], prepared["b2"],
      prepared["wfc"], prepared["bfc"])
    return out_pad[:, :num_classes]


# ------------------------------ init / reference ----------------------------
def init_params(key, num_channels=3, num_out_ch=(8, 16), img_w=16, img_h=16,
                num_classes=102):
    k1, k2, k3, k4, k5, k6 = jax.random.split(key, 6)
    c1, c2 = num_out_ch
    f_in = (img_w // 4) * (img_h // 4) * c2
    return {
        "conv1_w": jax.random.normal(k1, (c1, num_channels, 3, 3), jnp.float32) * 0.1,
        "conv1_b": jax.random.normal(k2, (c1,), jnp.float32) * 0.1,
        "conv2_w": jax.random.normal(k3, (c2, c1, 3, 3), jnp.float32) * 0.1,
        "conv2_b": jax.random.normal(k4, (c2,), jnp.float32) * 0.1,
        "fc_w": jax.random.normal(k5, (num_classes, f_in), jnp.float32) * 0.05,
        "fc_b": jax.random.normal(k6, (num_classes,), jnp.float32) * 0.05,
    }


def mycnn_reference(params, x_nchw):
    x = jnp.transpose(x_nchw, (0, 2, 3, 1))

    def conv(x, w, b):
        y = jax.lax.conv_general_dilated(
            x, jnp.transpose(w, (2, 3, 1, 0)), (1, 1), "SAME",
            dimension_numbers=("NHWC", "HWIO", "NHWC"),
            precision=jax.lax.Precision.HIGHEST)
        return jax.nn.relu(y + b)

    def pool(x):
        return jax.lax.reduce_window(x, -jnp.inf, jax.lax.max,
                                     (1, 2, 2, 1), (1, 2, 2, 1), "VALID")

    x = pool(conv(x, params["conv1_w"], params["conv1_b"]))
    x = pool(conv(x, params["conv2_w"], params["conv2_b"]))
    xf = jnp.transpose(x, (0, 3, 1, 2)).reshape(x.shape[0], -1)
    return xf @ params["fc_w"].T + params["fc_b"]


if __name__ == "__main__":
    key = jax.random.PRNGKey(0)
    kx_, kp = jax.random.split(key)
    # small shapes: batch=2, channels=3, spatial=16x16 -> fc in_features = 4*4*16
    x = jax.random.normal(kx_, (2, 3, 16, 16), jnp.float32)
    params = init_params(kp, num_channels=3, num_out_ch=(8, 16),
                         img_w=16, img_h=16, num_classes=102)

    prepared = prepare_params(params, img_h=16, img_w=16)   # one-time weight prep
    fwd = jax.jit(mycnn_forward, static_argnums=(2,))

    out = jax.block_until_ready(fwd(prepared, x, 102))
    assert out.shape == (2, 102), out.shape

    # Accuracy contract: bf16 MXU operands vs f32 HIGHEST-precision reference.
    ref = mycnn_reference(params, x)
    assert jnp.allclose(out, ref, rtol=5e-2, atol=5e-2), \
        float(jnp.max(jnp.abs(out - ref)))

    print("KERNEL_OK")
</pallas_src>

<mosaic_0001>
module attributes {stable_mosaic.version = 11 : i64} {
  func.func @_mycnn_fused_kernel(%arg0: i32, %arg1: memref<2x18x54xf32, #tpu.memory_space<vmem>>, %arg2: memref<3x54x128xbf16, #tpu.memory_space<vmem>>, %arg3: memref<1x128xf32, #tpu.memory_space<vmem>>, %arg4: memref<3x128x128xbf16, #tpu.memory_space<vmem>>, %arg5: memref<1x128xf32, #tpu.memory_space<vmem>>, %arg6: memref<4x128x128xbf16, #tpu.memory_space<vmem>>, %arg7: memref<1x128xf32, #tpu.memory_space<vmem>>, %arg8: memref<2x128xf32, #tpu.memory_space<vmem>>, %arg9: memref<32x128xf32, #tpu.memory_space<vmem>>, %arg10: memref<20x128xf32, #tpu.memory_space<vmem>>, %arg11: memref<8x128xf32, #tpu.memory_space<vmem>>) attributes {dimension_semantics = [#tpu.dimension_semantics<arbitrary>], iteration_bounds = array<i64: 1>, scalar_prefetch = 0 : i64, scratch_operands = 3 : i64, tpu.core_type = #tpu.core_type<tc>, window_params = [{pipeline_mode = #tpu.pipeline_mode<synchronous>, transform_indices = @transform_0, window_bounds = array<i64: 2, 18, 54>}, {pipeline_mode = #tpu.pipeline_mode<synchronous>, transform_indices = @transform_1, window_bounds = array<i64: 3, 54, 128>}, {pipeline_mode = #tpu.pipeline_mode<synchronous>, transform_indices = @transform_2, window_bounds = array<i64: 1, 128>}, {pipeline_mode = #tpu.pipeline_mode<synchronous>, transform_indices = @transform_3, window_bounds = array<i64: 3, 128, 128>}, {pipeline_mode = #tpu.pipeline_mode<synchronous>, transform_indices = @transform_4, window_bounds = array<i64: 1, 128>}, {pipeline_mode = #tpu.pipeline_mode<synchronous>, transform_indices = @transform_5, window_bounds = array<i64: 4, 128, 128>}, {pipeline_mode = #tpu.pipeline_mode<synchronous>, transform_indices = @transform_6, window_bounds = array<i64: 1, 128>}, {pipeline_mode = #tpu.pipeline_mode<synchronous>, transform_indices = @transform_7, window_bounds = array<i64: 2, 128>}]} {
    %cst = arith.constant 0.000000e+00 : f32
    %0 = vector.broadcast %cst : f32 to vector<32x128xf32>
    %c0 = arith.constant 0 : index
    %c0_0 = arith.constant 0 : index
    %c0_1 = arith.constant 0 : index
    %1 = vector.load %arg1[%c0, %c0_0, %c0_1] : memref<2x18x54xf32, #tpu.memory_space<vmem>>, vector<1x16x54xf32>
    %2 = vector.shape_cast %1 : vector<1x16x54xf32> to vector<16x54xf32>
    %c1 = arith.constant 1 : index
    %c0_2 = arith.constant 0 : index
    %c0_3 = arith.constant 0 : index
    %3 = vector.load %arg1[%c1, %c0_2, %c0_3] : memref<2x18x54xf32, #tpu.memory_space<vmem>>, vector<1x16x54xf32>
    %4 = vector.shape_cast %3 : vector<1x16x54xf32> to vector<16x54xf32>
    %5 = tpu.concatenate %2, %4 in 0 : vector<16x54xf32>, vector<16x54xf32> -> vector<32x54xf32>
    %6 = arith.truncf %5 : vector<32x54xf32> to vector<32x54xbf16>
    %c0_4 = arith.constant 0 : index
    %c0_5 = arith.constant 0 : index
    %c0_6 = arith.constant 0 : index
    %7 = vector.load %arg2[%c0_4, %c0_5, %c0_6] : memref<3x54x128xbf16, #tpu.memory_space<vmem>>, vector<1x54x128xbf16>
    %8 = vector.shape_cast %7 : vector<1x54x128xbf16> to vector<54x128xbf16>
    %cst_7 = arith.constant dense<0.000000e+00> : vector<32x128xf32>
    %9 = tpu.matmul %6, %8, %cst_7 {dimension_numbers = #tpu.dot_dimension_numbers<[1], [0], [0], [1], [0, 0, 1, 1], [], []>} : vector<32x54xbf16>, vector<54x128xbf16>, vector<32x128xf32> -> vector<32x128xf32>
    %10 = arith.addf %0, %9 : vector<32x128xf32>
    %c0_8 = arith.constant 0 : index
    %c1_9 = arith.constant 1 : index
    %c0_10 = arith.constant 0 : index
    %11 = vector.load %arg1[%c0_8, %c1_9, %c0_10] : memref<2x18x54xf32, #tpu.memory_space<vmem>>, vector<1x16x54xf32>
    %12 = vector.shape_cast %11 : vector<1x16x54xf32> to vector<16x54xf32>
    %c1_11 = arith.constant 1 : index
    %c1_12 = arith.constant 1 : index
    %c0_13 = arith.constant 0 : index
    %13 = vector.load %arg1[%c1_11, %c1_12, %c0_13] : memref<2x18x54xf32, #tpu.memory_space<vmem>>, vector<1x16x54xf32>
    %14 = vector.shape_cast %13 : vector<1x16x54xf32> to vector<16x54xf32>
    %15 = tpu.concatenate %12, %14 in 0 : vector<16x54xf32>, vector<16x54xf32> -> vector<32x54xf32>
    %16 = arith.truncf %15 : vector<32x54xf32> to vector<32x54xbf16>
    %c1_14 = arith.constant 1 : index
    %c0_15 = arith.constant 0 : index
    %c0_16 = arith.constant 0 : index
    %17 = vector.load %arg2[%c1_14, %c0_15, %c0_16] : memref<3x54x128xbf16, #tpu.memory_space<vmem>>, vector<1x54x128xbf16>
    %18 = vector.shape_cast %17 : vector<1x54x128xbf16> to vector<54x128xbf16>
    %cst_17 = arith.constant dense<0.000000e+00> : vector<32x128xf32>
    %19 = tpu.matmul %16, %18, %cst_17 {dimension_numbers = #tpu.dot_dimension_numbers<[1], [0], [0], [1], [0, 0, 1, 1], [], []>} : vector<32x54xbf16>, vector<54x128xbf16>, vector<32x128xf32> -> vector<32x128xf32>
    %20 = arith.addf %10, %19 : vector<32x128xf32>
    %c0_18 = arith.constant 0 : index
    %c2 = arith.constant 2 : index
    %c0_19 = arith.constant 0 : index
    %21 = vector.load %arg1[%c0_18, %c2, %c0_19] : memref<2x18x54xf32, #tpu.memory_space<vmem>>, vector<1x16x54xf32>
    %22 = vector.shape_cast %21 : vector<1x16x54xf32> to vector<16x54xf32>
    %c1_20 = arith.constant 1 : index
    %c2_21 = arith.constant 2 : index
    %c0_22 = arith.constant 0 : index
    %23 = vector.load %arg1[%c1_20, %c2_21, %c0_22] : memref<2x18x54xf32, #tpu.memory_space<vmem>>, vector<1x16x54xf32>
    %24 = vector.shape_cast %23 : vector<1x16x54xf32> to vector<16x54xf32>
    %25 = tpu.concatenate %22, %24 in 0 : vector<16x54xf32>, vector<16x54xf32> -> vector<32x54xf32>
    %26 = arith.truncf %25 : vector<32x54xf32> to vector<32x54xbf16>
    %c2_23 = arith.constant 2 : index
    %c0_24 = arith.constant 0 : index
    %c0_25 = arith.constant 0 : index
    %27 = vector.load %arg2[%c2_23, %c0_24, %c0_25] : memref<3x54x128xbf16, #tpu.memory_space<vmem>>, vector<1x54x128xbf16>
    %28 = vector.shape_cast %27 : vector<1x54x128xbf16> to vector<54x128xbf16>
    %cst_26 = arith.constant dense<0.000000e+00> : vector<32x128xf32>
    %29 = tpu.matmul %26, %28, %cst_26 {dimension_numbers = #tpu.dot_dimension_numbers<[1], [0], [0], [1], [0, 0, 1, 1], [], []>} : vector<32x54xbf16>, vector<54x128xbf16>, vector<32x128xf32> -> vector<32x128xf32>
    %30 = arith.addf %20, %29 : vector<32x128xf32>
    %c0_27 = arith.constant 0 : index
    %c0_28 = arith.constant 0 : index
    %31 = vector.load %arg3[%c0_27, %c0_28] : memref<1x128xf32, #tpu.memory_space<vmem>>, vector<1x128xf32>
    %32 = vector.broadcast %31 : vector<1x128xf32> to vector<32x128xf32>
    %33 = arith.addf %30, %32 : vector<32x128xf32>
    %cst_29 = arith.constant 0.000000e+00 : f32
    %34 = vector.broadcast %cst_29 : f32 to vector<32x128xf32>
    %35 = arith.maximumf %33, %34 : vector<32x128xf32>
    %c0_30 = arith.constant 0 : index
    %c0_31 = arith.constant 0 : index
    %36 = vector.load %arg9[%c0_30, %c0_31] : memref<32x128xf32, #tpu.memory_space<vmem>>, vector<32x128xf32>
    tpu.vector_store %arg9[%c0_30, %c0_31], %35 {strides = array<i32>} : memref<32x128xf32, #tpu.memory_space<vmem>>, vector<32x128xf32>,
    %c0_32 = arith.constant 0 : index
    %c0_33 = arith.constant 0 : index
    %37 = tpu.strided_load %arg9[%c0_32, %c0_33] {strides = array<i32: 2, 1>} : memref<32x128xf32, #tpu.memory_space<vmem>>, vector<16x128xf32>
    %c1_34 = arith.constant 1 : index
    %c0_35 = arith.constant 0 : index
    %38 = tpu.strided_load %arg9[%c1_34, %c0_35] {strides = array<i32: 2, 1>} : memref<32x128xf32, #tpu.memory_space<vmem>>, vector<16x128xf32>
    %39 = arith.maximumf %37, %38 : vector<16x128xf32>
    %c120_i32 = arith.constant 120 : i32
    %40 = tpu.dynamic_rotate %39 by %c120_i32 dim 1 : vector<16x128xf32>, i32 -> vector<16x128xf32>
    %41 = arith.maximumf %39, %40 : vector<16x128xf32>
    %cst_36 = arith.constant 0.000000e+00 : f32
    %42 = vector.broadcast %cst_36 : f32 to vector<20x128xf32>
    %c0_37 = arith.constant 0 : index
    %c0_38 = arith.constant 0 : index
    %43 = vector.load %arg10[%c0_37, %c0_38] : memref<20x128xf32, #tpu.memory_space<vmem>>, vector<20x128xf32>
    tpu.vector_store %arg10[%c0_37, %c0_38], %42 {strides = array<i32>} : memref<20x128xf32, #tpu.memory_space<vmem>>, vector<20x128xf32>,
    %44 = vector.extract_strided_slice %41 {offsets = [0, 0], sizes = [8, 128], strides = [1, 1]} : vector<16x128xf32> to vector<8x128xf32>
    %c1_39 = arith.constant 1 : index
    %c0_40 = arith.constant 0 : index
    %45 = vector.load %arg10[%c1_39, %c0_40] : memref<20x128xf32, #tpu.memory_space<vmem>>, vector<8x128xf32>
    tpu.vector_store %arg10[%c1_39, %c0_40], %44 {strides = array<i32>} : memref<20x128xf32, #tpu.memory_space<vmem>>, vector<8x128xf32>,
    %46 = vector.extract_strided_slice %41 {offsets = [8, 0], sizes = [8, 128], strides = [1, 1]} : vector<16x128xf32> to vector<8x128xf32>
    %c11 = arith.constant 11 : index
    %c0_41 = arith.constant 0 : index
    %47 = vector.load %arg10[%c11, %c0_41] : memref<20x128xf32, #tpu.memory_space<vmem>>, vector<8x128xf32>
    tpu.vector_store %arg10[%c11, %c0_41], %46 {strides = array<i32>} : memref<20x128xf32, #tpu.memory_space<vmem>>, vector<8x128xf32>,
    %cst_42 = arith.constant 0.000000e+00 : f32
    %48 = vector.broadcast %cst_42 : f32 to vector<16x128xf32>
    %c0_43 = arith.constant 0 : index
    %c0_44 = arith.constant 0 : index
    %49 = vector.load %arg10[%c0_43, %c0_44] : memref<20x128xf32, #tpu.memory_space<vmem>>, vector<8x128xf32>
    %c10 = arith.constant 10 : index
    %c0_45 = arith.constant 0 : index
    %50 = vector.load %arg10[%c10, %c0_45] : memref<20x128xf32, #tpu.memory_space<vmem>>, vector<8x128xf32>
    %51 = tpu.concatenate %49, %50 in 0 : vector<8x128xf32>, vector<8x128xf32> -> vector<16x128xf32>
    %52 = arith.truncf %51 : vector<16x128xf32> to vector<16x128xbf16>
    %c0_46 = arith.constant 0 : index
    %c0_47 = arith.constant 0 : index
    %c0_48 = arith.constant 0 : index
    %53 = vector.load %arg4[%c0_46, %c0_47, %c0_48] : memref<3x128x128xbf16, #tpu.memory_space<vmem>>, vector<1x128x128xbf16>
    %54 = vector.shape_cast %53 : vector<1x128x128xbf16> to vector<128x128xbf16>
    %cst_49 = arith.constant dense<0.000000e+00> : vector<16x128xf32>
    %55 = tpu.matmul %52, %54, %cst_49 {dimension_numbers = #tpu.dot_dimension_numbers<[1], [0], [0], [1], [0, 0, 1, 1], [], []>} : vector<16x128xbf16>, vector<128x128xbf16>, vector<16x128xf32> -> vector<16x128xf32>
    %56 = arith.addf %48, %55 : vector<16x128xf32>
    %c1_50 = arith.constant 1 : index
    %c0_51 = arith.constant 0 : index
    %57 = vector.load %arg10[%c1_50, %c0_51] : memref<20x128xf32, #tpu.memory_space<vmem>>, vector<8x128xf32>
    %c11_52 = arith.constant 11 : index
    %c0_53 = arith.constant 0 : index
    %58 = vector.load %arg10[%c11_52, %c0_53] : memref<20x128xf32, #tpu.memory_space<vmem>>, vector<8x128xf32>
    %59 = tpu.concatenate %57, %58 in 0 : vector<8x128xf32>, vector<8x128xf32> -> vector<16x128xf32>
    %60 = arith.truncf %59 : vector<16x128xf32> to vector<16x128xbf16>
    %c1_54 = arith.constant 1 : index
    %c0_55 = arith.constant 0 : index
    %c0_56 = arith.constant 0 : index
    %61 = vector.load %arg4[%c1_54, %c0_55, %c0_56] : memref<3x128x128xbf16, #tpu.memory_space<vmem>>, vector<1x128x128xbf16>
    %62 = vector.shape_cast %61 : vector<1x128x128xbf16> to vector<128x128xbf16>
    %cst_57 = arith.constant dense<0.000000e+00> : vector<16x128xf32>
    %63 = tpu.matmul %60, %62, %cst_57 {dimension_numbers = #tpu.dot_dimension_numbers<[1], [0], [0], [1], [0, 0, 1, 1], [], []>} : vector<16x128xbf16>, vector<128x128xbf16>, vector<16x128xf32> -> vector<16x128xf32>
    %64 = arith.addf %56, %63 : vector<16x128xf32>
    %c2_58 = arith.constant 2 : index
    %c0_59 = arith.constant 0 : index
    %65 = vector.load %arg10[%c2_58, %c0_59] : memref<20x128xf32, #tpu.memory_space<vmem>>, vector<8x128xf32>
    %c12 = arith.constant 12 : index
    %c0_60 = arith.constant 0 : index
    %66 = vector.load %arg10[%c12, %c0_60] : memref<20x128xf32, #tpu.memory_space<vmem>>, vector<8x128xf32>
    %67 = tpu.concatenate %65, %66 in 0 : vector<8x128xf32>, vector<8x128xf32> -> vector<16x128xf32>
    %68 = arith.truncf %67 : vector<16x128xf32> to vector<16x128xbf16>
    %c2_61 = arith.constant 2 : index
    %c0_62 = arith.constant 0 : index
    %c0_63 = arith.constant 0 : index
    %69 = vector.load %arg4[%c2_61, %c0_62, %c0_63] : memref<3x128x128xbf16, #tpu.memory_space<vmem>>, vector<1x128x128xbf16>
    %70 = vector.shape_cast %69 : vector<1x128x128xbf16> to vector<128x128xbf16>
    %cst_64 = arith.constant dense<0.000000e+00> : vector<16x128xf32>
    %71 = tpu.matmul %68, %70, %cst_64 {dimension_numbers = #tpu.dot_dimension_numbers<[1], [0], [0], [1], [0, 0, 1, 1], [], []>} : vector<16x128xbf16>, vector<128x128xbf16>, vector<16x128xf32> -> vector<16x128xf32>
    %72 = arith.addf %64, %71 : vector<16x128xf32>
    %c0_65 = arith.constant 0 : index
    %c0_66 = arith.constant 0 : index
    %73 = vector.load %arg5[%c0_65, %c0_66] : memref<1x128xf32, #tpu.memory_space<vmem>>, vector<1x128xf32>
    %74 = vector.broadcast %73 : vector<1x128xf32> to vector<16x128xf32>
    %75 = arith.addf %72, %74 : vector<16x128xf32>
    %cst_67 = arith.constant 0.000000e+00 : f32
    %76 = vector.broadcast %cst_67 : f32 to vector<16x128xf32>
    %77 = arith.maximumf %75, %76 : vector<16x128xf32>
    %c0_68 = arith.constant 0 : index
    %c0_69 = arith.constant 0 : index
    %78 = vector.load %arg9[%c0_68, %c0_69] : memref<32x128xf32, #tpu.memory_space<vmem>>, vector<16x128xf32>
    tpu.vector_store %arg9[%c0_68, %c0_69], %77 {strides = array<i32>} : memref<32x128xf32, #tpu.memory_space<vmem>>, vector<16x128xf32>,
    %c0_70 = arith.constant 0 : index
    %c0_71 = arith.constant 0 : index
    %79 = tpu.strided_load %arg9[%c0_70, %c0_71] {strides = array<i32: 2, 1>} : memref<32x128xf32, #tpu.memory_space<vmem>>, vector<8x128xf32>
    %c1_72 = arith.constant 1 : index
    %c0_73 = arith.constant 0 : index
    %80 = tpu.strided_load %arg9[%c1_72, %c0_73] {strides = array<i32: 2, 1>} : memref<32x128xf32, #tpu.memory_space<vmem>>, vector<8x128xf32>
    %81 = arith.maximumf %79, %80 : vector<8x128xf32>
    %c112_i32 = arith.constant 112 : i32
    %82 = tpu.dynamic_rotate %81 by %c112_i32 dim 1 : vector<8x128xf32>, i32 -> vector<8x128xf32>
    %83 = arith.maximumf %81, %82 : vector<8x128xf32>
    %c0_74 = arith.constant 0 : index
    %c0_75 = arith.constant 0 : index
    %84 = vector.load %arg11[%c0_74, %c0_75] : memref<8x128xf32, #tpu.memory_space<vmem>>, vector<8x128xf32>
    tpu.vector_store %arg11[%c0_74, %c0_75], %83 {strides = array<i32>} : memref<8x128xf32, #tpu.memory_space<vmem>>, vector<8x128xf32>,
    %cst_76 = arith.constant 0.000000e+00 : f32
    %85 = vector.broadcast %cst_76 : f32 to vector<2x128xf32>
    %c0_77 = arith.constant 0 : index
    %c0_78 = arith.constant 0 : index
    %86 = tpu.strided_load %arg11[%c0_77, %c0_78] {strides = array<i32: 4, 1>} : memref<8x128xf32, #tpu.memory_space<vmem>>, vector<2x128xf32>
    %87 = arith.truncf %86 : vector<2x128xf32> to vector<2x128xbf16>
    %c0_79 = arith.constant 0 : index
    %c0_80 = arith.constant 0 : index
    %c0_81 = arith.constant 0 : index
    %88 = vector.load %arg6[%c0_79, %c0_80, %c0_81] : memref<4x128x128xbf16, #tpu.memory_space<vmem>>, vector<1x128x128xbf16>
    %89 = vector.shape_cast %88 : vector<1x128x128xbf16> to vector<128x128xbf16>
    %cst_82 = arith.constant dense<0.000000e+00> : vector<2x128xf32>
    %90 = tpu.matmul %87, %89, %cst_82 {dimension_numbers = #tpu.dot_dimension_numbers<[1], [0], [0], [1], [0, 0, 1, 1], [], []>} : vector<2x128xbf16>, vector<128x128xbf16>, vector<2x128xf32> -> vector<2x128xf32>
    %91 = arith.addf %85, %90 : vector<2x128xf32>
    %c1_83 = arith.constant 1 : index
    %c0_84 = arith.constant 0 : index
    %92 = tpu.strided_load %arg11[%c1_83, %c0_84] {strides = array<i32: 4, 1>} : memref<8x128xf32, #tpu.memory_space<vmem>>, vector<2x128xf32>
    %93 = arith.truncf %92 : vector<2x128xf32> to vector<2x128xbf16>
    %c1_85 = arith.constant 1 : index
    %c0_86 = arith.constant 0 : index
    %c0_87 = arith.constant 0 : index
    %94 = vector.load %arg6[%c1_85, %c0_86, %c0_87] : memref<4x128x128xbf16, #tpu.memory_space<vmem>>, vector<1x128x128xbf16>
    %95 = vector.shape_cast %94 : vector<1x128x128xbf16> to vector<128x128xbf16>
    %cst_88 = arith.constant dense<0.000000e+00> : vector<2x128xf32>
    %96 = tpu.matmul %93, %95, %cst_88 {dimension_numbers = #tpu.dot_dimension_numbers<[1], [0], [0], [1], [0, 0, 1, 1], [], []>} : vector<2x128xbf16>, vector<128x128xbf16>, vector<2x128xf32> -> vector<2x128xf32>
    %97 = arith.addf %91, %96 : vector<2x128xf32>
    %c2_89 = arith.constant 2 : index
    %c0_90 = arith.constant 0 : index
    %98 = tpu.strided_load %arg11[%c2_89, %c0_90] {strides = array<i32: 4, 1>} : memref<8x128xf32, #tpu.memory_space<vmem>>, vector<2x128xf32>
    %99 = arith.truncf %98 : vector<2x128xf32> to vector<2x128xbf16>
    %c2_91 = arith.constant 2 : index
    %c0_92 = arith.constant 0 : index
    %c0_93 = arith.constant 0 : index
    %100 = vector.load %arg6[%c2_91, %c0_92, %c0_93] : memref<4x128x128xbf16, #tpu.memory_space<vmem>>, vector<1x128x128xbf16>
    %101 = vector.shape_cast %100 : vector<1x128x128xbf16> to vector<128x128xbf16>
    %cst_94 = arith.constant dense<0.000000e+00> : vector<2x128xf32>
    %102 = tpu.matmul %99, %101, %cst_94 {dimension_numbers = #tpu.dot_dimension_numbers<[1], [0], [0], [1], [0, 0, 1, 1], [], []>} : vector<2x128xbf16>, vector<128x128xbf16>, vector<2x128xf32> -> vector<2x128xf32>
    %103 = arith.addf %97, %102 : vector<2x128xf32>
    %c3 = arith.constant 3 : index
    %c0_95 = arith.constant 0 : index
    %104 = tpu.strided_load %arg11[%c3, %c0_95] {strides = array<i32: 4, 1>} : memref<8x128xf32, #tpu.memory_space<vmem>>, vector<2x128xf32>
    %105 = arith.truncf %104 : vector<2x128xf32> to vector<2x128xbf16>
    %c3_96 = arith.constant 3 : index
    %c0_97 = arith.constant 0 : index
    %c0_98 = arith.constant 0 : index
    %106 = vector.load %arg6[%c3_96, %c0_97, %c0_98] : memref<4x128x128xbf16, #tpu.memory_space<vmem>>, vector<1x128x128xbf16>
    %107 = vector.shape_cast %106 : vector<1x128x128xbf16> to vector<128x128xbf16>
    %cst_99 = arith.constant dense<0.000000e+00> : vector<2x128xf32>
    %108 = tpu.matmul %105, %107, %cst_99 {dimension_numbers = #tpu.dot_dimension_numbers<[1], [0], [0], [1], [0, 0, 1, 1], [], []>} : vector<2x128xbf16>, vector<128x128xbf16>, vector<2x128xf32> -> vector<2x128xf32>
    %109 = arith.addf %103, %108 : vector<2x128xf32>
    %c0_100 = arith.constant 0 : index
    %c0_101 = arith.constant 0 : index
    %110 = vector.load %arg7[%c0_100, %c0_101] : memref<1x128xf32, #tpu.memory_space<vmem>>, vector<1x128xf32>
    %111 = vector.broadcast %110 : vector<1x128xf32> to vector<2x128xf32>
    %112 = arith.addf %109, %111 : vector<2x128xf32>
    %c0_102 = arith.constant 0 : index
    %c0_103 = arith.constant 0 : index
    %113 = vector.load %arg8[%c0_102, %c0_103] : memref<2x128xf32, #tpu.memory_space<vmem>>, vector<2x128xf32>
    tpu.vector_store %arg8[%c0_102, %c0_103], %112 {strides = array<i32>} : memref<2x128xf32, #tpu.memory_space<vmem>>, vector<2x128xf32>,
    return
  }
  func.func @transform_0(%arg0: i32) -> (i32, i32, i32) {
    %c0_i32 = arith.constant 0 : i32
    %c0_i32_0 = arith.constant 0 : i32
    %c0_i32_1 = arith.constant 0 : i32
    %c0_i32_2 = arith.constant 0 : i32
    return %c0_i32, %c0_i32_0, %c0_i32_1 : i32, i32, i32
  }
  func.func @transform_1(%arg0: i32) -> (i32, i32, i32) {
    %c0_i32 = arith.constant 0 : i32
    %c0_i32_0 = arith.constant 0 : i32
    %c0_i32_1 = arith.constant 0 : i32
    %c0_i32_2 = arith.constant 0 : i32
    return %c0_i32, %c0_i32_0, %c0_i32_1 : i32, i32, i32
  }
  func.func @transform_2(%arg0: i32) -> (i32, i32) {
    %c0_i32 = arith.constant 0 : i32
    %c0_i32_0 = arith.constant 0 : i32
    %c0_i32_1 = arith.constant 0 : i32
    return %c0_i32, %c0_i32_0 : i32, i32
  }
  func.func @transform_3(%arg0: i32) -> (i32, i32, i32) {
    %c0_i32 = arith.constant 0 : i32
    %c0_i32_0 = arith.constant 0 : i32
    %c0_i32_1 = arith.constant 0 : i32
    %c0_i32_2 = arith.constant 0 : i32
    return %c0_i32, %c0_i32_0, %c0_i32_1 : i32, i32, i32
  }
  func.func @transform_4(%arg0: i32) -> (i32, i32) {
    %c0_i32 = arith.constant 0 : i32
    %c0_i32_0 = arith.constant 0 : i32
    %c0_i32_1 = arith.constant 0 : i32
    return %c0_i32, %c0_i32_0 : i32, i32
  }
  func.func @transform_5(%arg0: i32) -> (i32, i32, i32) {
    %c0_i32 = arith.constant 0 : i32
    %c0_i32_0 = arith.constant 0 : i32
    %c0_i32_1 = arith.constant 0 : i32
    %c0_i32_2 = arith.constant 0 : i32
    return %c0_i32, %c0_i32_0, %c0_i32_1 : i32, i32, i32
  }
  func.func @transform_6(%arg0: i32) -> (i32, i32) {
    %c0_i32 = arith.constant 0 : i32
    %c0_i32_0 = arith.constant 0 : i32
    %c0_i32_1 = arith.constant 0 : i32
    return %c0_i32, %c0_i32_0 : i32, i32
  }
  func.func @transform_7(%arg0: i32) -> (i32, i32) {
    %c0_i32 = arith.constant 0 : i32
    %c0_i32_0 = arith.constant 0 : i32
    %c0_i32_1 = arith.constant 0 : i32
    return %c0_i32, %c0_i32_0 : i32, i32
  }
}

</mosaic_0001>

<llo_original>
// kernel: mycnn_forward.1
$region0: #{mycnn_forward.1}
  #allocation0 [shape = 'u32[]', space=smem, size = 0x4, offset = 0x4, fixed_abs, tag = 'smem constant byte address 0x4 - core index']
  #allocation1 [shape = 'u32[144,128]{1,0:T(1,128)}', space=vmem, size = 0x12000, scoped, tag = 'internal scratch']
  #allocation2 [shape = 'f32[32,128]{1,0:T(8,128)}', space=vmem, size = 0x4000, scoped, tag = 'scratch operand']
  #allocation3 [shape = 'f32[20,128]{1,0:T(8,128)}', space=vmem, size = 0x3000, scoped, tag = 'scratch operand']
  #allocation4 [shape = 'f32[8,128]{1,0:T(8,128)}', space=vmem, size = 0x1000, scoped, tag = 'scratch operand']
  %s0 = inlined_call_operand.vmem [shape: f32[2,18,54], index: 0, kind: input, shape index: {}]
  %s1 = inlined_call_operand.vmem [shape: bf16[3,54,128], index: 1, kind: input, shape index: {}]
  %s2 = inlined_call_operand.vmem [shape: f32[1,128], index: 2, kind: input, shape index: {}]
  %s3 = inlined_call_operand.vmem [shape: bf16[3,128,128], index: 3, kind: input, shape index: {}]
  %s4 = inlined_call_operand.vmem [shape: f32[1,128], index: 4, kind: input, shape index: {}]
  %s5 = inlined_call_operand.vmem [shape: bf16[4,128,128], index: 5, kind: input, shape index: {}]
  %s6 = inlined_call_operand.vmem [shape: f32[1,128], index: 6, kind: input, shape index: {}]
  %s7 = inlined_call_operand.hbm [shape: f32[2,128], index: 7, kind: output, shape index: {}]
  %s8 = sld [smem:[#allocation0]]
  $region38: #{mycnn_forward.1} parent=0
    _
  %s10 = ssub.s32 1, %s8
  %s11 = scalar_select 0, %s10, %s8
  $region1: #{mycnn_forward.1} parent=0
    #allocation5 [shape = 'u8[1024]{0}', space=vmem, size = 0x400, scoped, tag = 'output window, operand 0, single buffered']
    #allocation6 [shape = 's32[1]{0}', space=sflag, size = 0x4, scoped, tag = 'scoped memory for mycnn_forward.1']
    %12 = vsyncpa [#allocation6], 0
    // Predicated region
    $region2: #{mycnn_forward.1} parent=1 // pred_check
      _
    $region3: #{mycnn_forward.1} parent=1 // pred_check_branch
      %14 = sbr.rel (0) target = $region5
    $region4: #{mycnn_forward.1} parent=1 // pred_region
      _
    $region5: #{mycnn_forward.1} parent=1 // pred_fallthru
      _
    // Predicated region
    $region6: #{mycnn_forward.1} parent=1 // pred_check
      _
    $region7: #{mycnn_forward.1} parent=1 // pred_check_branch
      %16 = sbr.rel (0) target = $region9
    $region8: #{mycnn_forward.1} parent=1 // pred_region
      _
    $region9: #{mycnn_forward.1} parent=1 // pred_fallthru
      _
    // Predicated region
    $region10: #{mycnn_forward.1} parent=1 // pred_check
      _
    $region11: #{mycnn_forward.1} parent=1 // pred_check_branch
      %18 = sbr.rel (0) target = $region13
    $region12: #{mycnn_forward.1} parent=1 // pred_region
      _
    $region13: #{mycnn_forward.1} parent=1 // pred_fallthru
      _
    // Predicated region
    $region14: #{mycnn_forward.1} parent=1 // pred_check
      _
    $region15: #{mycnn_forward.1} parent=1 // pred_check_branch
      %20 = sbr.rel (0) target = $region17
    $region16: #{mycnn_forward.1} parent=1 // pred_region
      _
    $region17: #{mycnn_forward.1} parent=1 // pred_fallthru
      _
    // Predicated region
    $region18: #{mycnn_forward.1} parent=1 // pred_check
      _
    $region19: #{mycnn_forward.1} parent=1 // pred_check_branch
      %22 = sbr.rel (0) target = $region21
    $region20: #{mycnn_forward.1} parent=1 // pred_region
      _
    $region21: #{mycnn_forward.1} parent=1 // pred_fallthru
      _
    // Predicated region
    $region22: #{mycnn_forward.1} parent=1 // pred_check
      _
    $region23: #{mycnn_forward.1} parent=1 // pred_check_branch
      %24 = sbr.rel (0) target = $region25
    $region24: #{mycnn_forward.1} parent=1 // pred_region
      _
    $region25: #{mycnn_forward.1} parent=1 // pred_fallthru
      _
    // Predicated region
    $region26: #{mycnn_forward.1} parent=1 // pred_check
      _
    $region27: #{mycnn_forward.1} parent=1 // pred_check_branch
      %26 = sbr.rel (0) target = $region29
    $region28: #{mycnn_forward.1} parent=1 // pred_region
      _
    $region29: #{mycnn_forward.1} parent=1 // pred_fallthru
      _
    %v28 = vld [vmem:[%s0] sm:$0xff]
    %v29 = vld [vmem:[%s0 + $0x8] sm:$0xff]
    %s30 = scalar_lea.vmem %s0, 24
    %v31 = vld [vmem:[%s30] sm:$0xff]
    %v32 = vld [vmem:[%s30 + $0x8] sm:$0xff]
    %v33 = vpack.c.bf16 %v29, %v28
    %v34 = vpack.c.bf16 %v32, %v31
    %v35 = vld [vmem:[%s1] sm:$0xf]
    %v36 = vld [vmem:[%s1 + $0x4] sm:$0xf]
    %v37 = vld [vmem:[%s1 + $0x8] sm:$0xf]
    %v38 = vld [vmem:[%s1 + $0xc] sm:$0xf]
    %v39 = vld [vmem:[%s1 + $0x10] sm:$0xf]
    %v40 = vld [vmem:[%s1 + $0x14] sm:$0xf]
    %v41 = vld [vmem:[%s1 + $0x18] sm:$0x7]
    %v42 = vld [vmem:[%s0 + $0x1] sm:$0xff]
    %v43 = vld [vmem:[%s0 + $0x9] sm:$0xff]
    %v44 = vld [vmem:[%s30 + $0x1] sm:$0xff]
    %v45 = vld [vmem:[%s30 + $0x9] sm:$0xff]
    %v46 = vpack.c.bf16 %v43, %v42
    %v47 = vpack.c.bf16 %v45, %v44
    %s48 = scalar_lea.vmem %s1, 28
    %v49 = vld [vmem:[%s48] sm:$0xf]
    %v50 = vld [vmem:[%s48 + $0x4] sm:$0xf]
    %v51 = vld [vmem:[%s48 + $0x8] sm:$0xf]
    %v52 = vld [vmem:[%s48 + $0xc] sm:$0xf]
    %v53 = vld [vmem:[%s48 + $0x10] sm:$0xf]
    %v54 = vld [vmem:[%s48 + $0x14] sm:$0xf]
    %v55 = vld [vmem:[%s48 + $0x18] sm:$0x7]
    %v63 = vunpack.c.l.b16 %v49
    %v64 = vunpack.c.l.b16 %v50
    %v65 = vunpack.c.l.b16 %v51
    %v66 = vunpack.c.l.b16 %v52
    %v67 = vunpack.c.l.b16 %v53
    %v68 = vunpack.c.l.b16 %v54
    %v69 = vunpack.c.l.b16 %v55
    %v70 = vpack.c.b16 %v64, %v63
    %v71 = vpack.c.b16 %v66, %v65
    %v72 = vpack.c.b16 %v68, %v67
    %v73 = vpack.c.b16 %v69, %v69
    %vm77 = vcmask 441344
    %v79 = vsel %vm77, %v46, 0
    %v82 = vsel %vm77, %v47, 0
    %vm84 = vcmask 1042432
    %v86 = vsel %vm84, %v73, 0
    %88 = vmatprep.subr.bf16.mxu0 0
    %89 = vmatpush1.bf16.msra.mxu0 %v70
    %90 = vmatprep.subr.bf16.mxu0 0
    %91 = vmatpush1.bf16.msra.mxu0 %v71
    %92 = vmatprep.subr.bf16.mxu0 0
    %93 = vmatpush1.bf16.msra.mxu0 %v72
    %94 = vmatprep.subr.bf16.mxu0 0
    %95 = vmatpush1.bf16.msra.mxu0 %v86
    %96 = vmatprep.subr.bf16.mxu0 0
    %97 = vmatpush1.bf16.msra.mxu0 0
    %98 = vmatprep.subr.bf16.mxu0 0
    %99 = vmatpush1.bf16.msra.mxu0 0
    %100 = vmatprep.subr.bf16.mxu0 0
    %101 = vmatpush1.bf16.msra.mxu0 0
    %102 = vmatprep.subr.bf16.mxu0 0
    %103 = vmatpush1.bf16.msra.mxu0 0
    %104 = vmatprep.subr.bf16.mxu0 0
    %105 = vmatpush1.bf16.msra.mxu0 0
    %106 = vmatprep.subr.bf16.mxu0 0
    %107 = vmatpush1.bf16.msra.mxu0 0
    %108 = vmatprep.subr.bf16.mxu0 0
    %109 = vmatpush1.bf16.msra.mxu0 0
    %110 = vmatprep.subr.bf16.mxu0 0
    %111 = vmatpush1.bf16.msra.mxu0 0
    %112 = vmatprep.subr.bf16.mxu0 0
    %113 = vmatpush1.bf16.msra.mxu0 0
    %114 = vmatprep.subr.bf16.mxu0 0
    %115 = vmatpush1.bf16.msra.mxu0 0
    %116 = vmatprep.subr.bf16.mxu0 0
    %117 = vmatpush1.bf16.msra.mxu0 0
    %118 = vmatprep.subr.bf16.mxu0 0
    %119 = vmatpush1.bf16.msra.mxu0 0
    %120 = vmatprep.mubr.bf16.mxu0 0
    %121 = vmatmul.mubr.bf16.gmra.mrb[0].mxu0 %v79
    %v122 = vpop.f32.mrb[0].mxu0
    %v123 = vadd.f32 0.0, %v122
    %v124 = vpop.f32.mrb[0].mxu0
    %v125 = vpop.f32.mrb[0].mxu0
    %v126 = vadd.f32 0.0, %v125
    %v127 = vpop.f32.mrb[0].mxu0
    %128 = vmatprep.mubr.bf16.mxu0 0
    %129 = vmatmul.mubr.bf16.gmra.mrb[0].mxu0 %v82
    %v130 = vpop.f32.mrb[0].mxu0
    %v131 = vadd.f32 0.0, %v130
    %v132 = vpop.f32.mrb[0].mxu0
    %v133 = vpop.f32.mrb[0].mxu0
    %v134 = vadd.f32 0.0, %v133
    %v135 = vpop.f32.mrb[0].mxu0
    %136 = vdwg.mxu0
    %v144 = vunpack.c.l.b16 %v35
    %v145 = vunpack.c.l.b16 %v36
    %v146 = vunpack.c.l.b16 %v37
    %v147 = vunpack.c.l.b16 %v38
    %v148 = vunpack.c.l.b16 %v39
    %v149 = vunpack.c.l.b16 %v40
    %v150 = vunpack.c.l.b16 %v41
    %v151 = vpack.c.b16 %v145, %v144
    %v152 = vpack.c.b16 %v147, %v146
    %v153 = vpack.c.b16 %v149, %v148
    %v154 = vpack.c.b16 %v150, %v150
    %v159 = vsel %vm77, %v33, 0
    %v162 = vsel %vm77, %v34, 0
    %v165 = vsel %vm84, %v154, 0
    %167 = vmatprep.subr.bf16.mxu0 0
    %168 = vmatpush1.bf16.msra.mxu0 %v151
    %169 = vmatprep.subr.bf16.mxu0 0
    %170 = vmatpush1.bf16.msra.mxu0 %v152
    %171 = vmatprep.subr.bf16.mxu0 0
    %172 = vmatpush1.bf16.msra.mxu0 %v153
    %173 = vmatprep.subr.bf16.mxu0 0
    %174 = vmatpush1.bf16.msra.mxu0 %v165
    %175 = vmatprep.subr.bf16.mxu0 0
    %176 = vmatpush1.bf16.msra.mxu0 0
    %177 = vmatprep.subr.bf16.mxu0 0
    %178 = vmatpush1.bf16.msra.mxu0 0
    %179 = vmatprep.subr.bf16.mxu0 0
    %180 = vmatpush1.bf16.msra.mxu0 0
    %181 = vmatprep.subr.bf16.mxu0 0
    %182 = vmatpush1.bf16.msra.mxu0 0
    %183 = vmatprep.subr.bf16.mxu0 0
    %184 = vmatpush1.bf16.msra.mxu0 0
    %185 = vmatprep.subr.bf16.mxu0 0
    %186 = vmatpush1.bf16.msra.mxu0 0
    %187 = vmatprep.subr.bf16.mxu0 0
    %188 = vmatpush1.bf16.msra.mxu0 0
    %189 = vmatprep.subr.bf16.mxu0 0
    %190 = vmatpush1.bf16.msra.mxu0 0
    %191 = vmatprep.subr.bf16.mxu0 0
    %192 = vmatpush1.bf16.msra.mxu0 0
    %193 = vmatprep.subr.bf16.mxu0 0
    %194 = vmatpush1.bf16.msra.mxu0 0
    %195 = vmatprep.subr.bf16.mxu0 0
    %196 = vmatpush1.bf16.msra.mxu0 0
    %197 = vmatprep.subr.bf16.mxu0 0
    %198 = vmatpush1.bf16.msra.mxu0 0
    %199 = vmatprep.mubr.bf16.mxu0 0
    %200 = vmatmul.mubr.bf16.gmra.mrb[0].mxu0 %v159
    %v201 = vpop.f32.mrb[0].mxu0
    %v202 = vadd.f32 %v123, %v201
    %v203 = vpop.f32.mrb[0].mxu0
    %v204 = vpop.f32.mrb[0].mxu0
    %v205 = vadd.f32 %v126, %v204
    %v206 = vpop.f32.mrb[0].mxu0
    %207 = vmatprep.mubr.bf16.mxu0 0
    %208 = vmatmul.mubr.bf16.gmra.mrb[0].mxu0 %v162
    %v209 = vpop.f32.mrb[0].mxu0
    %v210 = vadd.f32 %v131, %v209
    %v211 = vpop.f32.mrb[0].mxu0
    %v212 = vpop.f32.mrb[0].mxu0
    %v213 = vadd.f32 %v134, %v212
    %v214 = vpop.f32.mrb[0].mxu0
    %215 = vdwg.mxu0
    %v216 = vld [vmem:[%s0 + $0x2] sm:$0xff]
    %v217 = vld [vmem:[%s0 + $0xa] sm:$0xff]
    %v218 = vld [vmem:[%s30 + $0x2] sm:$0xff]
    %v219 = vld [vmem:[%s30 + $0xa] sm:$0xff]
    %v220 = vpack.c.bf16 %v217, %v216
    %v221 = vpack.c.bf16 %v219, %v218
    %s222 = scalar_lea.vmem %s1, 56
    %v223 = vld [vmem:[%s222] sm:$0xf]
    %v224 = vld [vmem:[%s222 + $0x4] sm:$0xf]
    %v225 = vld [vmem:[%s222 + $0x8] sm:$0xf]
    %v226 = vld [vmem:[%s222 + $0xc] sm:$0xf]
    %v227 = vld [vmem:[%s222 + $0x10] sm:$0xf]
    %v228 = vld [vmem:[%s222 + $0x14] sm:$0xf]
    %v229 = vld [vmem:[%s222 + $0x18] sm:$0x7]
    %v237 = vunpack.c.l.b16 %v223
    %v238 = vunpack.c.l.b16 %v224
    %v239 = vunpack.c.l.b16 %v225
    %v240 = vunpack.c.l.b16 %v226
    %v241 = vunpack.c.l.b16 %v227
    %v242 = vunpack.c.l.b16 %v228
    %v243 = vunpack.c.l.b16 %v229
    %v244 = vpack.c.b16 %v238, %v237
    %v245 = vpack.c.b16 %v240, %v239
    %v246 = vpack.c.b16 %v242, %v241
    %v247 = vpack.c.b16 %v243, %v243
    %v252 = vsel %vm77, %v220, 0
    %v255 = vsel %vm77, %v221, 0
    %v258 = vsel %vm84, %v247, 0
    %260 = vmatprep.subr.bf16.mxu0 0
    %261 = vmatpush1.bf16.msra.mxu0 %v244
    %262 = vmatprep.subr.bf16.mxu0 0
    %263 = vmatpush1.bf16.msra.mxu0 %v245
    %264 = vmatprep.subr.bf16.mxu0 0
    %265 = vmatpush1.bf16.msra.mxu0 %v246
    %266 = vmatprep.subr.bf16.mxu0 0
    %267 = vmatpush1.bf16.msra.mxu0 %v258
    %268 = vmatprep.subr.bf16.mxu0 0
    %269 = vmatpush1.bf16.msra.mxu0 0
    %270 = vmatprep.subr.bf16.mxu0 0
    %271 = vmatpush1.bf16.msra.mxu0 0
    %272 = vmatprep.subr.bf16.mxu0 0
    %273 = vmatpush1.bf16.msra.mxu0 0
    %274 = vmatprep.subr.bf16.mxu0 0
    %275 = vmatpush1.bf16.msra.mxu0 0
    %276 = vmatprep.subr.bf16.mxu0 0
    %277 = vmatpush1.bf16.msra.mxu0 0
    %278 = vmatprep.subr.bf16.mxu0 0
    %279 = vmatpush1.bf16.msra.mxu0 0
    %280 = vmatprep.subr.bf16.mxu0 0
    %281 = vmatpush1.bf16.msra.mxu0 0
    %282 = vmatprep.subr.bf16.mxu0 0
    %283 = vmatpush1.bf16.msra.mxu0 0
    %284 = vmatprep.subr.bf16.mxu0 0
    %285 = vmatpush1.bf16.msra.mxu0 0
    %286 = vmatprep.subr.bf16.mxu0 0
    %287 = vmatpush1.bf16.msra.mxu0 0
    %288 = vmatprep.subr.bf16.mxu0 0
    %289 = vmatpush1.bf16.msra.mxu0 0
    %290 = vmatprep.subr.bf16.mxu0 0
    %291 = vmatpush1.bf16.msra.mxu0 0
    %292 = vmatprep.mubr.bf16.mxu0 0
    %293 = vmatmul.mubr.bf16.gmra.mrb[0].mxu0 %v252
    %v294 = vpop.f32.mrb[0].mxu0
    %v295 = vadd.f32 0.0, %v294
    %v296 = vpop.f32.mrb[0].mxu0
    %v297 = vpop.f32.mrb[0].mxu0
    %v298 = vadd.f32 0.0, %v297
    %v299 = vpop.f32.mrb[0].mxu0
    %300 = vmatprep.mubr.bf16.mxu0 0
    %301 = vmatmul.mubr.bf16.gmra.mrb[0].mxu0 %v255
    %v302 = vpop.f32.mrb[0].mxu0
    %v303 = vadd.f32 0.0, %v302
    %v304 = vpop.f32.mrb[0].mxu0
    %v305 = vpop.f32.mrb[0].mxu0
    %v306 = vadd.f32 0.0, %v305
    %v307 = vpop.f32.mrb[0].mxu0
    %308 = vdwg.mxu0
    %v309 = vadd.f32 %v202, %v295
    %v310 = vadd.f32 %v205, %v298
    %v311 = vadd.f32 %v210, %v303
    %v312 = vadd.f32 %v213, %v306
    %v313 = vld [vmem:[%s2] sm:$0x1]
    %v315 = vlaneseq
    %v316 = vshrl.u32 %v315, 7
    %v317 = vsub.s32 0, %v316
    %v318 = vrot.slane %v313, %v317
    %v320 = vadd.f32 %v309, %v318
    %v321 = vadd.f32 %v310, %v318
    %v322 = vadd.f32 %v311, %v318
    %v323 = vadd.f32 %v312, %v318
    %v324 = vmax.f32 %v320, 0.0
    %v325 = vmax.f32 %v321, 0.0
    %v326 = vmax.f32 %v322, 0.0
    %v327 = vmax.f32 %v323, 0.0
    %328 = vst [vmem:[#allocation2] sm:$0xff] %v324
    %329 = vst [vmem:[#allocation2 + $0x8] sm:$0xff] %v325
    %330 = vst [vmem:[#allocation2 + $0x10] sm:$0xff] %v326
    %331 = vst [vmem:[#allocation2 + $0x18] sm:$0xff] %v327
    %v332 = vld [vmem:[#allocation2] ss:$2 sm:$0xff]
    %s333 = scalar_lea.vmem [#allocation2], 16
    %v334 = vld [vmem:[%s333] ss:$2 sm:$0xff]
    %s335 = scalar_lea.vmem [#allocation2], 1
    %v336 = vld [vmem:[%s335] ss:$2 sm:$0xff]
    %s337 = scalar_lea.vmem [#allocation2], 17
    %v338 = vld [vmem:[%s337] ss:$2 sm:$0xff]
    %v339 = vmax.f32 %v332, %v336
    %v340 = vmax.f32 %v334, %v338
    %341 = vrot.lane.b32.xlu0 %v339, 120
    %v342 = vpop.permute.xlu0 %341
    %343 = vrot.lane.b32.xlu0 %v340, 120
    %v344 = vpop.permute.xlu0 %343
    %v345 = vmax.f32 %v339, %v342
    %v346 = vmax.f32 %v340, %v344
    %347 = vst [vmem:[#allocation3] sm:$0xff] 0.0
    %348 = vst [vmem:[#allocation3 + $0x8] sm:$0xff] 0.0
    %349 = vst [vmem:[#allocation3 + $0x10] sm:$0xf] 0.0
    %350 = vst [vmem:[#allocation3 + $0x1] sm:$0xff] %v345
    %351 = vst [vmem:[#allocation3 + $0xb] sm:$0xff] %v346
    %v352 = vld [vmem:[#allocation3] sm:$0xff]
    %v353 = vld [vmem:[#allocation3 + $0xa] sm:$0xff]
    %v354 = vpack.c.bf16 %v353, %v352
    %v355 = vld [vmem:[%s3] sm:$0xf]
    %v356 = vld [vmem:[%s3 + $0x4] sm:$0xf]
    %v357 = vld [vmem:[%s3 + $0x8] sm:$0xf]
    %v358 = vld [vmem:[%s3 + $0xc] sm:$0xf]
    %v359 = vld [vmem:[%s3 + $0x10] sm:$0xf]
    %v360 = vld [vmem:[%s3 + $0x14] sm:$0xf]
    %v361 = vld [vmem:[%s3 + $0x18] sm:$0xf]
    %v362 = vld [vmem:[%s3 + $0x1c] sm:$0xf]
    %v363 = vld [vmem:[%s3 + $0x20] sm:$0xf]
    %v364 = vld [vmem:[%s3 + $0x24] sm:$0xf]
    %v365 = vld [vmem:[%s3 + $0x28] sm:$0xf]
    %v366 = vld [vmem:[%s3 + $0x2c] sm:$0xf]
    %v367 = vld [vmem:[%s3 + $0x30] sm:$0xf]
    %v368 = vld [vmem:[%s3 + $0x34] sm:$0xf]
    %v369 = vld [vmem:[%s3 + $0x38] sm:$0xf]
    %v370 = vld [vmem:[%s3 + $0x3c] sm:$0xf]
    %v371 = vld [vmem:[#allocation3 + $0x1] sm:$0xff]
    %v372 = vld [vmem:[#allocation3 + $0xb] sm:$0xff]
    %v373 = vpack.c.bf16 %v372, %v371
    %s374 = scalar_lea.vmem %s3, 64
    %v375 = vld [vmem:[%s374] sm:$0xf]
    %v376 = vld [vmem:[%s374 + $0x4] sm:$0xf]
    %v377 = vld [vmem:[%s374 + $0x8] sm:$0xf]
    %v378 = vld [vmem:[%s374 + $0xc] sm:$0xf]
    %v379 = vld [vmem:[%s374 + $0x10] sm:$0xf]
    %v380 = vld [vmem:[%s374 + $0x14] sm:$0xf]
    %v381 = vld [vmem:[%s374 + $0x18] sm:$0xf]
    %v382 = vld [vmem:[%s374 + $0x1c] sm:$0xf]
    %v383 = vld [vmem:[%s374 + $0x20] sm:$0xf]
    %v384 = vld [vmem:[%s374 + $0x24] sm:$0xf]
    %v385 = vld [vmem:[%s374 + $0x28] sm:$0xf]
    %v386 = vld [vmem:[%s374 + $0x2c] sm:$0xf]
    %v387 = vld [vmem:[%s374 + $0x30] sm:$0xf]
    %v388 = vld [vmem:[%s374 + $0x34] sm:$0xf]
    %v389 = vld [vmem:[%s374 + $0x38] sm:$0xf]
    %v390 = vld [vmem:[%s374 + $0x3c] sm:$0xf]
    %v407 = vunpack.c.l.b16 %v375
    %v408 = vunpack.c.l.b16 %v376
    %v409 = vunpack.c.l.b16 %v377
    %v410 = vunpack.c.l.b16 %v378
    %v411 = vunpack.c.l.b16 %v379
    %v412 = vunpack.c.l.b16 %v380
    %v413 = vunpack.c.l.b16 %v381
    %v414 = vunpack.c.l.b16 %v382
    %v415 = vunpack.c.l.b16 %v383
    %v416 = vunpack.c.l.b16 %v384
    %v417 = vunpack.c.l.b16 %v385
    %v418 = vunpack.c.l.b16 %v386
    %v419 = vunpack.c.l.b16 %v387
    %v420 = vunpack.c.l.b16 %v388
    %v421 = vunpack.c.l.b16 %v389
    %v422 = vunpack.c.l.b16 %v390
    %v423 = vpack.c.b16 %v408, %v407
    %v424 = vpack.c.b16 %v410, %v409
    %v425 = vpack.c.b16 %v412, %v411
    %v426 = vpack.c.b16 %v414, %v413
    %v427 = vpack.c.b16 %v416, %v415
    %v428 = vpack.c.b16 %v418, %v417
    %v429 = vpack.c.b16 %v420, %v419
    %v430 = vpack.c.b16 %v422, %v421
    %439 = vmatprep.subr.bf16.mxu0 0
    %440 = vmatpush1.bf16.msra.mxu0 %v423
    %441 = vmatprep.subr.bf16.mxu0 0
    %442 = vmatpush1.bf16.msra.mxu0 %v424
    %443 = vmatprep.subr.bf16.mxu0 0
    %444 = vmatpush1.bf16.msra.mxu0 %v425
    %445 = vmatprep.subr.bf16.mxu0 0
    %446 = vmatpush1.bf16.msra.mxu0 %v426
    %447 = vmatprep.subr.bf16.mxu0 0
    %448 = vmatpush1.bf16.msra.mxu0 %v427
    %449 = vmatprep.subr.bf16.mxu0 0
    %450 = vmatpush1.bf16.msra.mxu0 %v428
    %451 = vmatprep.subr.bf16.mxu0 0
    %452 = vmatpush1.bf16.msra.mxu0 %v429
    %453 = vmatprep.subr.bf16.mxu0 0
    %454 = vmatpush1.bf16.msra.mxu0 %v430
    %455 = vmatprep.subr.bf16.mxu0 0
    %456 = vmatpush1.bf16.msra.mxu0 0
    %457 = vmatprep.subr.bf16.mxu0 0
    %458 = vmatpush1.bf16.msra.mxu0 0
    %459 = vmatprep.subr.bf16.mxu0 0
    %460 = vmatpush1.bf16.msra.mxu0 0
    %461 = vmatprep.subr.bf16.mxu0 0
    %462 = vmatpush1.bf16.msra.mxu0 0
    %463 = vmatprep.subr.bf16.mxu0 0
    %464 = vmatpush1.bf16.msra.mxu0 0
    %465 = vmatprep.subr.bf16.mxu0 0
    %466 = vmatpush1.bf16.msra.mxu0 0
    %467 = vmatprep.subr.bf16.mxu0 0
    %468 = vmatpush1.bf16.msra.mxu0 0
    %469 = vmatprep.subr.bf16.mxu0 0
    %470 = vmatpush1.bf16.msra.mxu0 0
    %471 = vmatprep.mubr.bf16.mxu0 0
    %472 = vmatmul.mubr.bf16.gmra.mrb[0].mxu0 %v373
    %v473 = vpop.f32.mrb[0].mxu0
    %v474 = vadd.f32 0.0, %v473
    %v475 = vpop.f32.mrb[0].mxu0
    %v476 = vpop.f32.mrb[0].mxu0
    %v477 = vadd.f32 0.0, %v476
    %v478 = vpop.f32.mrb[0].mxu0
    %479 = vdwg.mxu0
    %v496 = vunpack.c.l.b16 %v355
    %v497 = vunpack.c.l.b16 %v356
    %v498 = vunpack.c.l.b16 %v357
    %v499 = vunpack.c.l.b16 %v358
    %v500 = vunpack.c.l.b16 %v359
    %v501 = vunpack.c.l.b16 %v360
    %v502 = vunpack.c.l.b16 %v361
    %v503 = vunpack.c.l.b16 %v362
    %v504 = vunpack.c.l.b16 %v363
    %v505 = vunpack.c.l.b16 %v364
    %v506 = vunpack.c.l.b16 %v365
    %v507 = vunpack.c.l.b16 %v366
    %v508 = vunpack.c.l.b16 %v367
    %v509 = vunpack.c.l.b16 %v368
    %v510 = vunpack.c.l.b16 %v369
    %v511 = vunpack.c.l.b16 %v370
    %v512 = vpack.c.b16 %v497, %v496
    %v513 = vpack.c.b16 %v499, %v498
    %v514 = vpack.c.b16 %v501, %v500
    %v515 = vpack.c.b16 %v503, %v502
    %v516 = vpack.c.b16 %v505, %v504
    %v517 = vpack.c.b16 %v507, %v506
    %v518 = vpack.c.b16 %v509, %v508
    %v519 = vpack.c.b16 %v511, %v510
    %528 = vmatprep.subr.bf16.mxu0 0
    %529 = vmatpush1.bf16.msra.mxu0 %v512
    %530 = vmatprep.subr.bf16.mxu0 0
    %531 = vmatpush1.bf16.msra.mxu0 %v513
    %532 = vmatprep.subr.bf16.mxu0 0
    %533 = vmatpush1.bf16.msra.mxu0 %v514
    %534 = vmatprep.subr.bf16.mxu0 0
    %535 = vmatpush1.bf16.msra.mxu0 %v515
    %536 = vmatprep.subr.bf16.mxu0 0
    %537 = vmatpush1.bf16.msra.mxu0 %v516
    %538 = vmatprep.subr.bf16.mxu0 0
    %539 = vmatpush1.bf16.msra.mxu0 %v517
    %540 = vmatprep.subr.bf16.mxu0 0
    %541 = vmatpush1.bf16.msra.mxu0 %v518
    %542 = vmatprep.subr.bf16.mxu0 0
    %543 = vmatpush1.bf16.msra.mxu0 %v519
    %544 = vmatprep.subr.bf16.mxu0 0
    %545 = vmatpush1.bf16.msra.mxu0 0
    %546 = vmatprep.subr.bf16.mxu0 0
    %547 = vmatpush1.bf16.msra.mxu0 0
    %548 = vmatprep.subr.bf16.mxu0 0
    %549 = vmatpush1.bf16.msra.mxu0 0
    %550 = vmatprep.subr.bf16.mxu0 0
    %551 = vmatpush1.bf16.msra.mxu0 0
    %552 = vmatprep.subr.bf16.mxu0 0
    %553 = vmatpush1.bf16.msra.mxu0 0
    %554 = vmatprep.subr.bf16.mxu0 0
    %555 = vmatpush1.bf16.msra.mxu0 0
    %556 = vmatprep.subr.bf16.mxu0 0
    %557 = vmatpush1.bf16.msra.mxu0 0
    %558 = vmatprep.subr.bf16.mxu0 0
    %559 = vmatpush1.bf16.msra.mxu0 0
    %560 = vmatprep.mubr.bf16.mxu0 0
    %561 = vmatmul.mubr.bf16.gmra.mrb[0].mxu0 %v354
    %v562 = vpop.f32.mrb[0].mxu0
    %v563 = vadd.f32 %v474, %v562
    %v564 = vpop.f32.mrb[0].mxu0
    %v565 = vpop.f32.mrb[0].mxu0
    %v566 = vadd.f32 %v477, %v565
    %v567 = vpop.f32.mrb[0].mxu0
    %568 = vdwg.mxu0
    %v569 = vld [vmem:[#allocation3 + $0x2] sm:$0xff]
    %v570 = vld [vmem:[#allocation3 + $0xc] sm:$0xff]
    %v571 = vpack.c.bf16 %v570, %v569
    %s572 = scalar_lea.vmem %s3, 128
    %v573 = vld [vmem:[%s572] sm:$0xf]
    %v574 = vld [vmem:[%s572 + $0x4] sm:$0xf]
    %v575 = vld [vmem:[%s572 + $0x8] sm:$0xf]
    %v576 = vld [vmem:[%s572 + $0xc] sm:$0xf]
    %v577 = vld [vmem:[%s572 + $0x10] sm:$0xf]
    %v578 = vld [vmem:[%s572 + $0x14] sm:$0xf]
    %v579 = vld [vmem:[%s572 + $0x18] sm:$0xf]
    %v580 = vld [vmem:[%s572 + $0x1c] sm:$0xf]
    %v581 = vld [vmem:[%s572 + $0x20] sm:$0xf]
    %v582 = vld [vmem:[%s572 + $0x24] sm:$0xf]
    %v583 = vld [vmem:[%s572 + $0x28] sm:$0xf]
    %v584 = vld [vmem:[%s572 + $0x2c] sm:$0xf]
    %v585 = vld [vmem:[%s572 + $0x30] sm:$0xf]
    %v586 = vld [vmem:[%s572 + $0x34] sm:$0xf]
    %v587 = vld [vmem:[%s572 + $0x38] sm:$0xf]
    %v588 = vld [vmem:[%s572 + $0x3c] sm:$0xf]
    %v605 = vunpack.c.l.b16 %v573
    %v606 = vunpack.c.l.b16 %v574
    %v607 = vunpack.c.l.b16 %v575
    %v608 = vunpack.c.l.b16 %v576
    %v609 = vunpack.c.l.b16 %v577
    %v610 = vunpack.c.l.b16 %v578
    %v611 = vunpack.c.l.b16 %v579
    %v612 = vunpack.c.l.b16 %v580
    %v613 = vunpack.c.l.b16 %v581
    %v614 = vunpack.c.l.b16 %v582
    %v615 = vunpack.c.l.b16 %v583
    %v616 = vunpack.c.l.b16 %v584
    %v617 = vunpack.c.l.b16 %v585
    %v618 = vunpack.c.l.b16 %v586
    %v619 = vunpack.c.l.b16 %v587
    %v620 = vunpack.c.l.b16 %v588
    %v621 = vpack.c.b16 %v606, %v605
    %v622 = vpack.c.b16 %v608, %v607
    %v623 = vpack.c.b16 %v610, %v609
    %v624 = vpack.c.b16 %v612, %v611
    %v625 = vpack.c.b16 %v614, %v613
    %v626 = vpack.c.b16 %v616, %v615
    %v627 = vpack.c.b16 %v618, %v617
    %v628 = vpack.c.b16 %v620, %v619
    %637 = vmatprep.subr.bf16.mxu0 0
    %638 = vmatpush1.bf16.msra.mxu0 %v621
    %639 = vmatprep.subr.bf16.mxu0 0
    %640 = vmatpush1.bf16.msra.mxu0 %v622
    %641 = vmatprep.subr.bf16.mxu0 0
    %642 = vmatpush1.bf16.msra.mxu0 %v623
    %643 = vmatprep.subr.bf16.mxu0 0
    %644 = vmatpush1.bf16.msra.mxu0 %v624
    %645 = vmatprep.subr.bf16.mxu0 0
    %646 = vmatpush1.bf16.msra.mxu0 %v625
    %647 = vmatprep.subr.bf16.mxu0 0
    %648 = vmatpush1.bf16.msra.mxu0 %v626
    %649 = vmatprep.subr.bf16.mxu0 0
    %650 = vmatpush1.bf16.msra.mxu0 %v627
    %651 = vmatprep.subr.bf16.mxu0 0
    %652 = vmatpush1.bf16.msra.mxu0 %v628
    %653 = vmatprep.subr.bf16.mxu0 0
    %654 = vmatpush1.bf16.msra.mxu0 0
    %655 = vmatprep.subr.bf16.mxu0 0
    %656 = vmatpush1.bf16.msra.mxu0 0
    %657 = vmatprep.subr.bf16.mxu0 0
    %658 = vmatpush1.bf16.msra.mxu0 0
    %659 = vmatprep.subr.bf16.mxu0 0
    %660 = vmatpush1.bf16.msra.mxu0 0
    %661 = vmatprep.subr.bf16.mxu0 0
    %662 = vmatpush1.bf16.msra.mxu0 0
    %663 = vmatprep.subr.bf16.mxu0 0
    %664 = vmatpush1.bf16.msra.mxu0 0
    %665 = vmatprep.subr.bf16.mxu0 0
    %666 = vmatpush1.bf16.msra.mxu0 0
    %667 = vmatprep.subr.bf16.mxu0 0
    %668 = vmatpush1.bf16.msra.mxu0 0
    %669 = vmatprep.mubr.bf16.mxu0 0
    %670 = vmatmul.mubr.bf16.gmra.mrb[0].mxu0 %v571
    %v671 = vpop.f32.mrb[0].mxu0
    %v672 = vadd.f32 0.0, %v671
    %v673 = vpop.f32.mrb[0].mxu0
    %v674 = vpop.f32.mrb[0].mxu0
    %v675 = vadd.f32 0.0, %v674
    %v676 = vpop.f32.mrb[0].mxu0
    %677 = vdwg.mxu0
    %v678 = vadd.f32 %v563, %v672
    %v679 = vadd.f32 %v566, %v675
    %v680 = vld [vmem:[%s4] sm:$0x1]
    %v682 = vlaneseq
    %v683 = vshrl.u32 %v682, 7
    %v684 = vsub.s32 0, %v683
    %v685 = vrot.slane %v680, %v684
    %v687 = vadd.f32 %v678, %v685
    %v688 = vadd.f32 %v679, %v685
    %v689 = vmax.f32 %v687, 0.0
    %v690 = vmax.f32 %v688, 0.0
    %691 = vst [vmem:[#allocation2] sm:$0xff] %v689
    %692 = vst [vmem:[#allocation2 + $0x8] sm:$0xff] %v690
    %v693 = vld [vmem:[#allocation2] ss:$2 sm:$0xff]
    %v694 = vld [vmem:[%s335] ss:$2 sm:$0xff]
    %v695 = vmax.f32 %v693, %v694
    %696 = vrot.lane.b32.xlu0 %v695, 112
    %v697 = vpop.permute.xlu0 %696
    %v698 = vmax.f32 %v695, %v697
    %699 = vst [vmem:[#allocation4] sm:$0xff] %v698
    %v700 = vld [vmem:[#allocation4] ss:$4 sm:$0x3]
    %v701 = vpack.c.bf16 %v700, %v700
    %v702 = vld [vmem:[%s5] sm:$0xf]
    %v703 = vld [vmem:[%s5 + $0x4] sm:$0xf]
    %v704 = vld [vmem:[%s5 + $0x8] sm:$0xf]
    %v705 = vld [vmem:[%s5 + $0xc] sm:$0xf]
    %v706 = vld [vmem:[%s5 + $0x10] sm:$0xf]
    %v707 = vld [vmem:[%s5 + $0x14] sm:$0xf]
    %v708 = vld [vmem:[%s5 + $0x18] sm:$0xf]
    %v709 = vld [vmem:[%s5 + $0x1c] sm:$0xf]
    %v710 = vld [vmem:[%s5 + $0x20] sm:$0xf]
    %v711 = vld [vmem:[%s5 + $0x24] sm:$0xf]
    %v712 = vld [vmem:[%s5 + $0x28] sm:$0xf]
    %v713 = vld [vmem:[%s5 + $0x2c] sm:$0xf]
    %v714 = vld [vmem:[%s5 + $0x30] sm:$0xf]
    %v715 = vld [vmem:[%s5 + $0x34] sm:$0xf]
    %v716 = vld [vmem:[%s5 + $0x38] sm:$0xf]
    %v717 = vld [vmem:[%s5 + $0x3c] sm:$0xf]
    %s718 = scalar_lea.vmem [#allocation4], 1
    %v719 = vld [vmem:[%s718] ss:$4 sm:$0x3]
    %v720 = vpack.c.bf16 %v719, %v719
    %s721 = scalar_lea.vmem %s5, 64
    %v722 = vld [vmem:[%s721] sm:$0xf]
    %v723 = vld [vmem:[%s721 + $0x4] sm:$0xf]
    %v724 = vld [vmem:[%s721 + $0x8] sm:$0xf]
    %v725 = vld [vmem:[%s721 + $0xc] sm:$0xf]
    %v726 = vld [vmem:[%s721 + $0x10] sm:$0xf]
    %v727 = vld [vmem:[%s721 + $0x14] sm:$0xf]
    %v728 = vld [vmem:[%s721 + $0x18] sm:$0xf]
    %v729 = vld [vmem:[%s721 + $0x1c] sm:$0xf]
    %v730 = vld [vmem:[%s721 + $0x20] sm:$0xf]
    %v731 = vld [vmem:[%s721 + $0x24] sm:$0xf]
    %v732 = vld [vmem:[%s721 + $0x28] sm:$0xf]
    %v733 = vld [vmem:[%s721 + $0x2c] sm:$0xf]
    %v734 = vld [vmem:[%s721 + $0x30] sm:$0xf]
    %v735 = vld [vmem:[%s721 + $0x34] sm:$0xf]
    %v736 = vld [vmem:[%s721 + $0x38] sm:$0xf]
    %v737 = vld [vmem:[%s721 + $0x3c] sm:$0xf]
    %v754 = vunpack.c.l.b16 %v722
    %v755 = vunpack.c.l.b16 %v723
    %v756 = vunpack.c.l.b16 %v724
    %v757 = vunpack.c.l.b16 %v725
    %v758 = vunpack.c.l.b16 %v726
    %v759 = vunpack.c.l.b16 %v727
    %v760 = vunpack.c.l.b16 %v728
    %v761 = vunpack.c.l.b16 %v729
    %v762 = vunpack.c.l.b16 %v730
    %v763 = vunpack.c.l.b16 %v731
    %v764 = vunpack.c.l.b16 %v732
    %v765 = vunpack.c.l.b16 %v733
    %v766 = vunpack.c.l.b16 %v734
    %v767 = vunpack.c.l.b16 %v735
    %v768 = vunpack.c.l.b16 %v736
    %v769 = vunpack.c.l.b16 %v737
    %v770 = vpack.c.b16 %v755, %v754
    %v771 = vpack.c.b16 %v757, %v756
    %v772 = vpack.c.b16 %v759, %v758
    %v773 = vpack.c.b16 %v761, %v760
    %v774 = vpack.c.b16 %v763, %v762
    %v775 = vpack.c.b16 %v765, %v764
    %v776 = vpack.c.b16 %v767, %v766
    %v777 = vpack.c.b16 %v769, %v768
    %786 = vmatprep.subr.bf16.mxu0 0
    %787 = vmatpush1.bf16.msra.mxu0 %v770
    %788 = vmatprep.subr.bf16.mxu0 0
    %789 = vmatpush1.bf16.msra.mxu0 %v771
    %790 = vmatprep.subr.bf16.mxu0 0
    %791 = vmatpush1.bf16.msra.mxu0 %v772
    %792 = vmatprep.subr.bf16.mxu0 0
    %793 = vmatpush1.bf16.msra.mxu0 %v773
    %794 = vmatprep.subr.bf16.mxu0 0
    %795 = vmatpush1.bf16.msra.mxu0 %v774
    %796 = vmatprep.subr.bf16.mxu0 0
    %797 = vmatpush1.bf16.msra.mxu0 %v775
    %798 = vmatprep.subr.bf16.mxu0 0
    %799 = vmatpush1.bf16.msra.mxu0 %v776
    %800 = vmatprep.subr.bf16.mxu0 0
    %801 = vmatpush1.bf16.msra.mxu0 %v777
    %802 = vmatprep.subr.bf16.mxu0 0
    %803 = vmatpush1.bf16.msra.mxu0 0
    %804 = vmatprep.subr.bf16.mxu0 0
    %805 = vmatpush1.bf16.msra.mxu0 0
    %806 = vmatprep.subr.bf16.mxu0 0
    %807 = vmatpush1.bf16.msra.mxu0 0
    %808 = vmatprep.subr.bf16.mxu0 0
    %809 = vmatpush1.bf16.msra.mxu0 0
    %810 = vmatprep.subr.bf16.mxu0 0
    %811 = vmatpush1.bf16.msra.mxu0 0
    %812 = vmatprep.subr.bf16.mxu0 0
    %813 = vmatpush1.bf16.msra.mxu0 0
    %814 = vmatprep.subr.bf16.mxu0 0
    %815 = vmatpush1.bf16.msra.mxu0 0
    %816 = vmatprep.subr.bf16.mxu0 0
    %817 = vmatpush1.bf16.msra.mxu0 0
    %818 = vmatprep.mubr.bf16.mxu0 0
    %819 = vmatmul.mubr.bf16.gmra.mrb[0].mxu0 %v720
    %v820 = vpop.f32.mrb[0].mxu0
    %v821 = vadd.f32 0.0, %v820
    %v822 = vpop.f32.mrb[0].mxu0
    %v823 = vpop.f32.mrb[0].mxu0
    %v824 = vpop.f32.mrb[0].mxu0
    %825 = vdwg.mxu0
    %v842 = vunpack.c.l.b16 %v702
    %v843 = vunpack.c.l.b16 %v703
    %v844 = vunpack.c.l.b16 %v704
    %v845 = vunpack.c.l.b16 %v705
    %v846 = vunpack.c.l.b16 %v706
    %v847 = vunpack.c.l.b16 %v707
    %v848 = vunpack.c.l.b16 %v708
    %v849 = vunpack.c.l.b16 %v709
    %v850 = vunpack.c.l.b16 %v710
    %v851 = vunpack.c.l.b16 %v711
    %v852 = vunpack.c.l.b16 %v712
    %v853 = vunpack.c.l.b16 %v713
    %v854 = vunpack.c.l.b16 %v714
    %v855 = vunpack.c.l.b16 %v715
    %v856 = vunpack.c.l.b16 %v716
    %v857 = vunpack.c.l.b16 %v717
    %v858 = vpack.c.b16 %v843, %v842
    %v859 = vpack.c.b16 %v845, %v844
    %v860 = vpack.c.b16 %v847, %v846
    %v861 = vpack.c.b16 %v849, %v848
    %v862 = vpack.c.b16 %v851, %v850
    %v863 = vpack.c.b16 %v853, %v852
    %v864 = vpack.c.b16 %v855, %v854
    %v865 = vpack.c.b16 %v857, %v856
    %874 = vmatprep.subr.bf16.mxu0 0
    %875 = vmatpush1.bf16.msra.mxu0 %v858
    %876 = vmatprep.subr.bf16.mxu0 0
    %877 = vmatpush1.bf16.msra.mxu0 %v859
    %878 = vmatprep.subr.bf16.mxu0 0
    %879 = vmatpush1.bf16.msra.mxu0 %v860
    %880 = vmatprep.subr.bf16.mxu0 0
    %881 = vmatpush1.bf16.msra.mxu0 %v861
    %882 = vmatprep.subr.bf16.mxu0 0
    %883 = vmatpush1.bf16.msra.mxu0 %v862
    %884 = vmatprep.subr.bf16.mxu0 0
    %885 = vmatpush1.bf16.msra.mxu0 %v863
    %886 = vmatprep.subr.bf16.mxu0 0
    %887 = vmatpush1.bf16.msra.mxu0 %v864
    %888 = vmatprep.subr.bf16.mxu0 0
    %889 = vmatpush1.bf16.msra.mxu0 %v865
    %890 = vmatprep.subr.bf16.mxu0 0
    %891 = vmatpush1.bf16.msra.mxu0 0
    %892 = vmatprep.subr.bf16.mxu0 0
    %893 = vmatpush1.bf16.msra.mxu0 0
    %894 = vmatprep.subr.bf16.mxu0 0
    %895 = vmatpush1.bf16.msra.mxu0 0
    %896 = vmatprep.subr.bf16.mxu0 0
    %897 = vmatpush1.bf16.msra.mxu0 0
    %898 = vmatprep.subr.bf16.mxu0 0
    %899 = vmatpush1.bf16.msra.mxu0 0
    %900 = vmatprep.subr.bf16.mxu0 0
    %901 = vmatpush1.bf16.msra.mxu0 0
    %902 = vmatprep.subr.bf16.mxu0 0
    %903 = vmatpush1.bf16.msra.mxu0 0
    %904 = vmatprep.subr.bf16.mxu0 0
    %905 = vmatpush1.bf16.msra.mxu0 0
    %906 = vmatprep.mubr.bf16.mxu0 0
    %907 = vmatmul.mubr.bf16.gmra.mrb[0].mxu0 %v701
    %v908 = vpop.f32.mrb[0].mxu0
    %v909 = vadd.f32 %v821, %v908
    %v910 = vpop.f32.mrb[0].mxu0
    %v911 = vpop.f32.mrb[0].mxu0
    %v912 = vpop.f32.mrb[0].mxu0
    %913 = vdwg.mxu0
    %s914 = scalar_lea.vmem [#allocation4], 2
    %v915 = vld [vmem:[%s914] ss:$4 sm:$0x3]
    %v916 = vpack.c.bf16 %v915, %v915
    %s917 = scalar_lea.vmem %s5, 128
    %v918 = vld [vmem:[%s917] sm:$0xf]
    %v919 = vld [vmem:[%s917 + $0x4] sm:$0xf]
    %v920 = vld [vmem:[%s917 + $0x8] sm:$0xf]
    %v921 = vld [vmem:[%s917 + $0xc] sm:$0xf]
    %v922 = vld [vmem:[%s917 + $0x10] sm:$0xf]
    %v923 = vld [vmem:[%s917 + $0x14] sm:$0xf]
    %v924 = vld [vmem:[%s917 + $0x18] sm:$0xf]
    %v925 = vld [vmem:[%s917 + $0x1c] sm:$0xf]
    %v926 = vld [vmem:[%s917 + $0x20] sm:$0xf]
    %v927 = vld [vmem:[%s917 + $0x24] sm:$0xf]
    %v928 = vld [vmem:[%s917 + $0x28] sm:$0xf]
    %v929 = vld [vmem:[%s917 + $0x2c] sm:$0xf]
    %v930 = vld [vmem:[%s917 + $0x30] sm:$0xf]
    %v931 = vld [vmem:[%s917 + $0x34] sm:$0xf]
    %v932 = vld [vmem:[%s917 + $0x38] sm:$0xf]
    %v933 = vld [vmem:[%s917 + $0x3c] sm:$0xf]
    %v950 = vunpack.c.l.b16 %v918
    %v951 = vunpack.c.l.b16 %v919
    %v952 = vunpack.c.l.b16 %v920
    %v953 = vunpack.c.l.b16 %v921
    %v954 = vunpack.c.l.b16 %v922
    %v955 = vunpack.c.l.b16 %v923
    %v956 = vunpack.c.l.b16 %v924
    %v957 = vunpack.c.l.b16 %v925
    %v958 = vunpack.c.l.b16 %v926
    %v959 = vunpack.c.l.b16 %v927
    %v960 = vunpack.c.l.b16 %v928
    %v961 = vunpack.c.l.b16 %v929
    %v962 = vunpack.c.l.b16 %v930
    %v963 = vunpack.c.l.b16 %v931
    %v964 = vunpack.c.l.b16 %v932
    %v965 = vunpack.c.l.b16 %v933
    %v966 = vpack.c.b16 %v951, %v950
    %v967 = vpack.c.b16 %v953, %v952
    %v968 = vpack.c.b16 %v955, %v954
    %v969 = vpack.c.b16 %v957, %v956
    %v970 = vpack.c.b16 %v959, %v958
    %v971 = vpack.c.b16 %v961, %v960
    %v972 = vpack.c.b16 %v963, %v962
    %v973 = vpack.c.b16 %v965, %v964
    %982 = vmatprep.subr.bf16.mxu0 0
    %983 = vmatpush1.bf16.msra.mxu0 %v966
    %984 = vmatprep.subr.bf16.mxu0 0
    %985 = vmatpush1.bf16.msra.mxu0 %v967
    %986 = vmatprep.subr.bf16.mxu0 0
    %987 = vmatpush1.bf16.msra.mxu0 %v968
    %988 = vmatprep.subr.bf16.mxu0 0
    %989 = vmatpush1.bf16.msra.mxu0 %v969
    %990 = vmatprep.subr.bf16.mxu0 0
    %991 = vmatpush1.bf16.msra.mxu0 %v970
    %992 = vmatprep.subr.bf16.mxu0 0
    %993 = vmatpush1.bf16.msra.mxu0 %v971
    %994 = vmatprep.subr.bf16.mxu0 0
    %995 = vmatpush1.bf16.msra.mxu0 %v972
    %996 = vmatprep.subr.bf16.mxu0 0
    %997 = vmatpush1.bf16.msra.mxu0 %v973
    %998 = vmatprep.subr.bf16.mxu0 0
    %999 = vmatpush1.bf16.msra.mxu0 0
    %1000 = vmatprep.subr.bf16.mxu0 0
    %1001 = vmatpush1.bf16.msra.mxu0 0
    %1002 = vmatprep.subr.bf16.mxu0 0
    %1003 = vmatpush1.bf16.msra.mxu0 0
    %1004 = vmatprep.subr.bf16.mxu0 0
    %1005 = vmatpush1.bf16.msra.mxu0 0
    %1006 = vmatprep.subr.bf16.mxu0 0
    %1007 = vmatpush1.bf16.msra.mxu0 0
    %1008 = vmatprep.subr.bf16.mxu0 0
    %1009 = vmatpush1.bf16.msra.mxu0 0
    %1010 = vmatprep.subr.bf16.mxu0 0
    %1011 = vmatpush1.bf16.msra.mxu0 0
    %1012 = vmatprep.subr.bf16.mxu0 0
    %1013 = vmatpush1.bf16.msra.mxu0 0
    %1014 = vmatprep.mubr.bf16.mxu0 0
    %1015 = vmatmul.mubr.bf16.gmra.mrb[0].mxu0 %v916
    %v1016 = vpop.f32.mrb[0].mxu0
    %v1017 = vadd.f32 0.0, %v1016
    %v1018 = vpop.f32.mrb[0].mxu0
    %v1019 = vpop.f32.mrb[0].mxu0
    %v1020 = vpop.f32.mrb[0].mxu0
    %1021 = vdwg.mxu0
    %v1022 = vadd.f32 %v909, %v1017
    %s1023 = scalar_lea.vmem [#allocation4], 3
    %v1024 = vld [vmem:[%s1023] ss:$4 sm:$0x3]
    %v1025 = vpack.c.bf16 %v1024, %v1024
    %s1026 = scalar_lea.vmem %s5, 192
    %v1027 = vld [vmem:[%s1026] sm:$0xf]
    %v1028 = vld [vmem:[%s1026 + $0x4] sm:$0xf]
    %v1029 = vld [vmem:[%s1026 + $0x8] sm:$0xf]
    %v1030 = vld [vmem:[%s1026 + $0xc] sm:$0xf]
    %v1031 = vld [vmem:[%s1026 + $0x10] sm:$0xf]
    %v1032 = vld [vmem:[%s1026 + $0x14] sm:$0xf]
    %v1033 = vld [vmem:[%s1026 + $0x18] sm:$0xf]
    %v1034 = vld [vmem:[%s1026 + $0x1c] sm:$0xf]
    %v1035 = vld [vmem:[%s1026 + $0x20] sm:$0xf]
    %v1036 = vld [vmem:[%s1026 + $0x24] sm:$0xf]
    %v1037 = vld [vmem:[%s1026 + $0x28] sm:$0xf]
    %v1038 = vld [vmem:[%s1026 + $0x2c] sm:$0xf]
    %v1039 = vld [vmem:[%s1026 + $0x30] sm:$0xf]
    %v1040 = vld [vmem:[%s1026 + $0x34] sm:$0xf]
    %v1041 = vld [vmem:[%s1026 + $0x38] sm:$0xf]
    %v1042 = vld [vmem:[%s1026 + $0x3c] sm:$0xf]
    %v1059 = vunpack.c.l.b16 %v1027
    %v1060 = vunpack.c.l.b16 %v1028
    %v1061 = vunpack.c.l.b16 %v1029
    %v1062 = vunpack.c.l.b16 %v1030
    %v1063 = vunpack.c.l.b16 %v1031
    %v1064 = vunpack.c.l.b16 %v1032
    %v1065 = vunpack.c.l.b16 %v1033
    %v1066 = vunpack.c.l.b16 %v1034
    %v1067 = vunpack.c.l.b16 %v1035
    %v1068 = vunpack.c.l.b16 %v1036
    %v1069 = vunpack.c.l.b16 %v1037
    %v1070 = vunpack.c.l.b16 %v1038
    %v1071 = vunpack.c.l.b16 %v1039
    %v1072 = vunpack.c.l.b16 %v1040
    %v1073 = vunpack.c.l.b16 %v1041
    %v1074 = vunpack.c.l.b16 %v1042
    %v1075 = vpack.c.b16 %v1060, %v1059
    %v1076 = vpack.c.b16 %v1062, %v1061
    %v1077 = vpack.c.b16 %v1064, %v1063
    %v1078 = vpack.c.b16 %v1066, %v1065
    %v1079 = vpack.c.b16 %v1068, %v1067
    %v1080 = vpack.c.b16 %v1070, %v1069
    %v1081 = vpack.c.b16 %v1072, %v1071
    %v1082 = vpack.c.b16 %v1074, %v1073
    %1091 = vmatprep.subr.bf16.mxu0 0
    %1092 = vmatpush1.bf16.msra.mxu0 %v1075
    %1093 = vmatprep.subr.bf16.mxu0 0
    %1094 = vmatpush1.bf16.msra.mxu0 %v1076
    %1095 = vmatprep.subr.bf16.mxu0 0
    %1096 = vmatpush1.bf16.msra.mxu0 %v1077
    %1097 = vmatprep.subr.bf16.mxu0 0
    %1098 = vmatpush1.bf16.msra.mxu0 %v1078
    %1099 = vmatprep.subr.bf16.mxu0 0
    %1100 = vmatpush1.bf16.msra.mxu0 %v1079
    %1101 = vmatprep.subr.bf16.mxu0 0
    %1102 = vmatpush1.bf16.msra.mxu0 %v1080
    %1103 = vmatprep.subr.bf16.mxu0 0
    %1104 = vmatpush1.bf16.msra.mxu0 %v1081
    %1105 = vmatprep.subr.bf16.mxu0 0
    %1106 = vmatpush1.bf16.msra.mxu0 %v1082
    %1107 = vmatprep.subr.bf16.mxu0 0
    %1108 = vmatpush1.bf16.msra.mxu0 0
    %1109 = vmatprep.subr.bf16.mxu0 0
    %1110 = vmatpush1.bf16.msra.mxu0 0
    %1111 = vmatprep.subr.bf16.mxu0 0
    %1112 = vmatpush1.bf16.msra.mxu0 0
    %1113 = vmatprep.subr.bf16.mxu0 0
    %1114 = vmatpush1.bf16.msra.mxu0 0
    %1115 = vmatprep.subr.bf16.mxu0 0
    %1116 = vmatpush1.bf16.msra.mxu0 0
    %1117 = vmatprep.subr.bf16.mxu0 0
    %1118 = vmatpush1.bf16.msra.mxu0 0
    %1119 = vmatprep.subr.bf16.mxu0 0
    %1120 = vmatpush1.bf16.msra.mxu0 0
    %1121 = vmatprep.subr.bf16.mxu0 0
    %1122 = vmatpush1.bf16.msra.mxu0 0
    %1123 = vmatprep.mubr.bf16.mxu0 0
    %1124 = vmatmul.mubr.bf16.gmra.mrb[0].mxu0 %v1025
    %v1125 = vpop.f32.mrb[0].mxu0
    %v1126 = vadd.f32 0.0, %v1125
    %v1127 = vpop.f32.mrb[0].mxu0
    %v1128 = vpop.f32.mrb[0].mxu0
    %v1129 = vpop.f32.mrb[0].mxu0
    %1130 = vdwg.mxu0
    %v1131 = vadd.f32 %v1022, %v1126
    %v1132 = vld [vmem:[%s6] sm:$0x1]
    %v1134 = vlaneseq
    %v1135 = vshrl.u32 %v1134, 7
    %v1136 = vsub.s32 0, %v1135
    %v1137 = vrot.slane %v1132, %v1136
    %v1139 = vadd.f32 %v1131, %v1137
    %1140 = vst [vmem:[#allocation5] sm:$0x3] %v1139
    // Predicated region
    $region30: #{mycnn_forward.1} parent=1 // pred_check
      _
    $region31: #{mycnn_forward.1} parent=1 // pred_check_branch
      %1142 = sbr.rel (0) target = $region33
    $region32: #{mycnn_forward.1} parent=1 // pred_region
      %s1144 = ssub.s32 32, 32
      %1145 = vsyncadd [#allocation6], %s1144
      %s1147 = sshll.u32 [#allocation5], 4
      %s1148 = int_to_ptr.vmem [resolvable:$true] %s1147
      %1150 = dma.vmem_to_hbm [thread:$0]  %s1148, 32, %s7, [#allocation6]
    $region33: #{mycnn_forward.1} parent=1 // pred_fallthru
      _
    // Predicated region
    $region34: #{mycnn_forward.1} parent=1 // pred_check
      _
    $region35: #{mycnn_forward.1} parent=1 // pred_check_branch
      %1152 = sbr.rel (0) target = $region37
    $region36: #{mycnn_forward.1} parent=1 // pred_region
      %1153 = dma.done [#allocation6], 32
    $region37: #{mycnn_forward.1} parent=1 // pred_fallthru
      _
    %1154 = vsyncpa [#allocation6], 1

</llo_original>
